<compile_context>
chip_gen: v5e
topology: v5e:2x2
jax: 0.10.0
libtpu: 0.0.40
codegen_flags: <defaults>
</compile_context>

<pallas_src>
import jax
import jax.numpy as jnp
from jax.experimental import pallas as pl
from jax.experimental.pallas import tpu as pltpu

Q_PAD = 128  # lane-dense width for the final (out_features == 1) layer


def critic_kernel(x_ref, u_ref,
                  w1x_ref, w1u_ref, b1_ref,
                  w2_ref, b2_ref,
                  w3_ref, b3_ref,
                  w4_ref, b4_ref,
                  o_ref):
    """Whole-network forward for one batch tile; weights stay resident in VMEM."""
    cdt = w1x_ref.dtype  # MXU input dtype (f32, or bf16 on v6e/v7x)

    x = x_ref[...].astype(cdt)                                            # [TM, S]
    u = u_ref[...].astype(cdt)                                            # [TM, A]

    # Fused concat:  cat([x, u], 1) @ W1  ==  x @ W1[:S] + u @ W1[S:]
    h1 = (jnp.dot(x, w1x_ref[...], preferred_element_type=jnp.float32) +
          jnp.dot(u, w1u_ref[...], preferred_element_type=jnp.float32))   # [TM, 256]
    h1 = jnp.maximum(h1 + b1_ref[...], 0.0)

    h2 = jnp.dot(h1.astype(cdt), w2_ref[...],
                 preferred_element_type=jnp.float32)                      # [TM, 256]
    h2 = jnp.maximum(h2 + b2_ref[...], 0.0)

    # Dropout(p=0.2) -> identity in eval/inference mode.
    # TODO(synk): training-mode dropout (pltpu.prng_seed / prng_random_bits
    #             masking with 1/(1-p) scaling) is not implemented.

    h3 = jnp.dot(h2.astype(cdt), w3_ref[...],
                 preferred_element_type=jnp.float32)                      # [TM, 128]
    h3 = jnp.maximum(h3 + b3_ref[...], 0.0)

    # Final layer with W4 zero-padded to [128, Q_PAD]: column 0 is the real q,
    # the rest are zeros.  Keeps the output block lane-dense (unmasked vst)
    # instead of a last-dim-1 masked store.
    q = jnp.dot(h3.astype(cdt), w4_ref[...],
                preferred_element_type=jnp.float32)                       # [TM, Q_PAD]
    o_ref[...] = (q + b4_ref[...]).astype(o_ref.dtype)


def _round_up(n, m):
    return ((n + m - 1) // m) * m


def prepare_critic_params(params, state_dim, compute_dtype=jnp.float32):
    """Convert (w, b) pairs (weights stored [in, out], biases [1, out]) into
    kernel-ready arrays: W1 split into state/action row-slices, W4/b4 padded
    to Q_PAD lanes, matmul operands cast to `compute_dtype` (biases kept f32)."""
    (w1, b1), (w2, b2), (w3, b3), (w4, b4) = params
    w1x, w1u = w1[:state_dim], w1[state_dim:]
    w4p = jnp.zeros((w4.shape[0], Q_PAD), jnp.float32).at[:, :w4.shape[1]].set(w4)
    b4p = jnp.zeros((1, Q_PAD), jnp.float32).at[:, :b4.shape[1]].set(b4)
    c = lambda a: a.astype(compute_dtype)
    f = lambda a: a.astype(jnp.float32)
    return (c(w1x), c(w1u), f(b1),
            c(w2), f(b2),
            c(w3), f(b3),
            c(w4p), f(b4p))


def critic_forward(x, u, kernel_params, *, block_b=128):
    """x: [B, state_dim], u: [B, action_dim] -> q: [B, 1] (float32)."""
    B, state_dim = x.shape
    action_dim = u.shape[1]

    # Batch tiling: pad B up to a sublane-aligned multiple of the tile size.
    block_b = min(block_b, _round_up(B, 8))
    Bp = _round_up(B, block_b)
    if Bp != B:
        x = jnp.pad(x, ((0, Bp - B), (0, 0)))
        u = jnp.pad(u, ((0, Bp - B), (0, 0)))
    x = x.astype(jnp.float32)
    u = u.astype(jnp.float32)

    grid = (Bp // block_b,)

    def batch_spec(feat):  # walks the batch axis with the grid
        return pl.BlockSpec((block_b, feat), lambda i: (i, 0))

    def resident_spec(shape):  # weights/biases: same block every grid step
        nd = len(shape)
        return pl.BlockSpec(shape, lambda i, _nd=nd: (0,) * _nd)

    in_specs = ([batch_spec(state_dim), batch_spec(action_dim)] +
                [resident_spec(p.shape) for p in kernel_params])

    out = pl.pallas_call(
        critic_kernel,
        out_shape=jax.ShapeDtypeStruct((Bp, Q_PAD), jnp.float32),
        grid=grid,
        in_specs=in_specs,
        out_specs=pl.BlockSpec((block_b, Q_PAD), lambda i: (i, 0)),
        compiler_params=pltpu.CompilerParams(
            dimension_semantics=("parallel",)),  # batch axis -> megacore on v7x
    )(x, u, *kernel_params)

    return out[:B, :1]


def init_critic_params(key, state_dim, action_dim):
    """Deterministic init matching the PyTorch module's shapes.

    Weights: Xavier-uniform (as in the reference __init__), stored [in, out].
    Biases:  PyTorch nn.Linear default U(-1/sqrt(fan_in), 1/sqrt(fan_in)),
             stored [1, out] for TPU-friendly broadcasting.
    """
    dims = [(state_dim + action_dim, 256), (256, 256), (256, 128), (128, 1)]
    params = []
    for fan_in, fan_out in dims:
        key, kw, kb = jax.random.split(key, 3)
        limit = (6.0 / (fan_in + fan_out)) ** 0.5
        w = jax.random.uniform(kw, (fan_in, fan_out), jnp.float32, -limit, limit)
        bb = 1.0 / (fan_in ** 0.5)
        b = jax.random.uniform(kb, (1, fan_out), jnp.float32, -bb, bb)
        params.append((w, b))
    return params


if __name__ == "__main__":
    state_dim, action_dim, batch = 16, 8, 256   # 2 batch tiles -> pipelined grid

    key = jax.random.PRNGKey(0)
    kx, ku, kp = jax.random.split(key, 3)

    x = jax.random.normal(kx, (batch, state_dim), jnp.float32)
    u = jax.random.normal(ku, (batch, action_dim), jnp.float32)
    params = init_critic_params(kp, state_dim, action_dim)

    # f32 compute for a tight numerics check; on v6e/v7x at large batch pass
    # compute_dtype=jnp.bfloat16 for MXU throughput (f32 accumulation kept).
    kparams = prepare_critic_params(params, state_dim, compute_dtype=jnp.float32)

    q = critic_forward(x, u, kparams, block_b=128)
    jax.block_until_ready(q)

    # cross-check against plain-JAX reference (unfused concat / unpadded fc4)
    (w1, b1), (w2, b2), (w3, b3), (w4, b4) = params
    xu = jnp.concatenate([x, u], axis=1)
    h = jnp.maximum(xu @ w1 + b1, 0.0)
    h = jnp.maximum(h @ w2 + b2, 0.0)
    h = jnp.maximum(h @ w3 + b3, 0.0)
    q_ref = h @ w4 + b4

    assert q.shape == (batch, 1)
    assert jnp.allclose(q, q_ref, atol=1e-4, rtol=1e-4)

    print("KERNEL_OK")
</pallas_src>

<mosaic_0001>
module attributes {stable_mosaic.version = 11 : i64} {
  func.func @critic_kernel(%arg0: i32, %arg1: memref<128x16xf32, #tpu.memory_space<vmem>>, %arg2: memref<128x8xf32, #tpu.memory_space<vmem>>, %arg3: memref<16x256xf32, #tpu.memory_space<vmem>>, %arg4: memref<8x256xf32, #tpu.memory_space<vmem>>, %arg5: memref<1x256xf32, #tpu.memory_space<vmem>>, %arg6: memref<256x256xf32, #tpu.memory_space<vmem>>, %arg7: memref<1x256xf32, #tpu.memory_space<vmem>>, %arg8: memref<256x128xf32, #tpu.memory_space<vmem>>, %arg9: memref<1x128xf32, #tpu.memory_space<vmem>>, %arg10: memref<128x128xf32, #tpu.memory_space<vmem>>, %arg11: memref<1x128xf32, #tpu.memory_space<vmem>>, %arg12: memref<128x128xf32, #tpu.memory_space<vmem>>) attributes {dimension_semantics = [#tpu.dimension_semantics<parallel>], iteration_bounds = array<i64: 2>, scalar_prefetch = 0 : i64, scratch_operands = 0 : i64, tpu.core_type = #tpu.core_type<tc>, window_params = [{transform_indices = @transform_0, window_bounds = array<i64: 128, 16>}, {transform_indices = @transform_1, window_bounds = array<i64: 128, 8>}, {pipeline_mode = #tpu.pipeline_mode<synchronous>, transform_indices = @transform_2, window_bounds = array<i64: 16, 256>}, {pipeline_mode = #tpu.pipeline_mode<synchronous>, transform_indices = @transform_3, window_bounds = array<i64: 8, 256>}, {pipeline_mode = #tpu.pipeline_mode<synchronous>, transform_indices = @transform_4, window_bounds = array<i64: 1, 256>}, {pipeline_mode = #tpu.pipeline_mode<synchronous>, transform_indices = @transform_5, window_bounds = array<i64: 256, 256>}, {pipeline_mode = #tpu.pipeline_mode<synchronous>, transform_indices = @transform_6, window_bounds = array<i64: 1, 256>}, {pipeline_mode = #tpu.pipeline_mode<synchronous>, transform_indices = @transform_7, window_bounds = array<i64: 256, 128>}, {pipeline_mode = #tpu.pipeline_mode<synchronous>, transform_indices = @transform_8, window_bounds = array<i64: 1, 128>}, {pipeline_mode = #tpu.pipeline_mode<synchronous>, transform_indices = @transform_9, window_bounds = array<i64: 128, 128>}, {pipeline_mode = #tpu.pipeline_mode<synchronous>, transform_indices = @transform_10, window_bounds = array<i64: 1, 128>}, {transform_indices = @transform_11, window_bounds = array<i64: 128, 128>}]} {
    %c0 = arith.constant 0 : index
    %c0_0 = arith.constant 0 : index
    %0 = vector.load %arg1[%c0, %c0_0] : memref<128x16xf32, #tpu.memory_space<vmem>>, vector<128x16xf32>
    %c0_1 = arith.constant 0 : index
    %c0_2 = arith.constant 0 : index
    %1 = vector.load %arg2[%c0_1, %c0_2] : memref<128x8xf32, #tpu.memory_space<vmem>>, vector<128x8xf32>
    %c0_3 = arith.constant 0 : index
    %c0_4 = arith.constant 0 : index
    %2 = vector.load %arg3[%c0_3, %c0_4] : memref<16x256xf32, #tpu.memory_space<vmem>>, vector<16x256xf32>
    %cst = arith.constant dense<0.000000e+00> : vector<128x256xf32>
    %3 = tpu.matmul %0, %2, %cst {dimension_numbers = #tpu.dot_dimension_numbers<[1], [0], [0], [1], [0, 0, 1, 1], [], []>} : vector<128x16xf32>, vector<16x256xf32>, vector<128x256xf32> -> vector<128x256xf32>
    %c0_5 = arith.constant 0 : index
    %c0_6 = arith.constant 0 : index
    %4 = vector.load %arg4[%c0_5, %c0_6] : memref<8x256xf32, #tpu.memory_space<vmem>>, vector<8x256xf32>
    %cst_7 = arith.constant dense<0.000000e+00> : vector<128x256xf32>
    %5 = tpu.matmul %1, %4, %cst_7 {dimension_numbers = #tpu.dot_dimension_numbers<[1], [0], [0], [1], [0, 0, 1, 1], [], []>} : vector<128x8xf32>, vector<8x256xf32>, vector<128x256xf32> -> vector<128x256xf32>
    %6 = arith.addf %3, %5 : vector<128x256xf32>
    %c0_8 = arith.constant 0 : index
    %c0_9 = arith.constant 0 : index
    %7 = vector.load %arg5[%c0_8, %c0_9] : memref<1x256xf32, #tpu.memory_space<vmem>>, vector<1x256xf32>
    %8 = vector.broadcast %7 : vector<1x256xf32> to vector<128x256xf32>
    %9 = arith.addf %6, %8 : vector<128x256xf32>
    %cst_10 = arith.constant 0.000000e+00 : f32
    %10 = vector.broadcast %cst_10 : f32 to vector<128x256xf32>
    %11 = arith.maximumf %9, %10 : vector<128x256xf32>
    %c0_11 = arith.constant 0 : index
    %c0_12 = arith.constant 0 : index
    %12 = vector.load %arg6[%c0_11, %c0_12] : memref<256x256xf32, #tpu.memory_space<vmem>>, vector<256x256xf32>
    %cst_13 = arith.constant dense<0.000000e+00> : vector<128x256xf32>
    %13 = tpu.matmul %11, %12, %cst_13 {dimension_numbers = #tpu.dot_dimension_numbers<[1], [0], [0], [1], [0, 0, 1, 1], [], []>} : vector<128x256xf32>, vector<256x256xf32>, vector<128x256xf32> -> vector<128x256xf32>
    %c0_14 = arith.constant 0 : index
    %c0_15 = arith.constant 0 : index
    %14 = vector.load %arg7[%c0_14, %c0_15] : memref<1x256xf32, #tpu.memory_space<vmem>>, vector<1x256xf32>
    %15 = vector.broadcast %14 : vector<1x256xf32> to vector<128x256xf32>
    %16 = arith.addf %13, %15 : vector<128x256xf32>
    %cst_16 = arith.constant 0.000000e+00 : f32
    %17 = vector.broadcast %cst_16 : f32 to vector<128x256xf32>
    %18 = arith.maximumf %16, %17 : vector<128x256xf32>
    %c0_17 = arith.constant 0 : index
    %c0_18 = arith.constant 0 : index
    %19 = vector.load %arg8[%c0_17, %c0_18] : memref<256x128xf32, #tpu.memory_space<vmem>>, vector<256x128xf32>
    %cst_19 = arith.constant dense<0.000000e+00> : vector<128x128xf32>
    %20 = tpu.matmul %18, %19, %cst_19 {dimension_numbers = #tpu.dot_dimension_numbers<[1], [0], [0], [1], [0, 0, 1, 1], [], []>} : vector<128x256xf32>, vector<256x128xf32>, vector<128x128xf32> -> vector<128x128xf32>
    %c0_20 = arith.constant 0 : index
    %c0_21 = arith.constant 0 : index
    %21 = vector.load %arg9[%c0_20, %c0_21] : memref<1x128xf32, #tpu.memory_space<vmem>>, vector<1x128xf32>
    %22 = vector.broadcast %21 : vector<1x128xf32> to vector<128x128xf32>
    %23 = arith.addf %20, %22 : vector<128x128xf32>
    %cst_22 = arith.constant 0.000000e+00 : f32
    %24 = vector.broadcast %cst_22 : f32 to vector<128x128xf32>
    %25 = arith.maximumf %23, %24 : vector<128x128xf32>
    %c0_23 = arith.constant 0 : index
    %c0_24 = arith.constant 0 : index
    %26 = vector.load %arg10[%c0_23, %c0_24] : memref<128x128xf32, #tpu.memory_space<vmem>>, vector<128x128xf32>
    %cst_25 = arith.constant dense<0.000000e+00> : vector<128x128xf32>
    %27 = tpu.matmul %25, %26, %cst_25 {dimension_numbers = #tpu.dot_dimension_numbers<[1], [0], [0], [1], [0, 0, 1, 1], [], []>} : vector<128x128xf32>, vector<128x128xf32>, vector<128x128xf32> -> vector<128x128xf32>
    %c0_26 = arith.constant 0 : index
    %c0_27 = arith.constant 0 : index
    %28 = vector.load %arg11[%c0_26, %c0_27] : memref<1x128xf32, #tpu.memory_space<vmem>>, vector<1x128xf32>
    %29 = vector.broadcast %28 : vector<1x128xf32> to vector<128x128xf32>
    %30 = arith.addf %27, %29 : vector<128x128xf32>
    %c0_28 = arith.constant 0 : index
    %c0_29 = arith.constant 0 : index
    %31 = vector.load %arg12[%c0_28, %c0_29] : memref<128x128xf32, #tpu.memory_space<vmem>>, vector<128x128xf32>
    tpu.vector_store %arg12[%c0_28, %c0_29], %30 {strides = array<i32>} : memref<128x128xf32, #tpu.memory_space<vmem>>, vector<128x128xf32>,
    return
  }
  func.func @transform_0(%arg0: i32) -> (i32, i32) {
    %c0_i32 = arith.constant 0 : i32
    %c0_i32_0 = arith.constant 0 : i32
    return %arg0, %c0_i32 : i32, i32
  }
  func.func @transform_1(%arg0: i32) -> (i32, i32) {
    %c0_i32 = arith.constant 0 : i32
    %c0_i32_0 = arith.constant 0 : i32
    return %arg0, %c0_i32 : i32, i32
  }
  func.func @transform_2(%arg0: i32) -> (i32, i32) {
    %c0_i32 = arith.constant 0 : i32
    %c0_i32_0 = arith.constant 0 : i32
    %c0_i32_1 = arith.constant 0 : i32
    return %c0_i32, %c0_i32_0 : i32, i32
  }
  func.func @transform_3(%arg0: i32) -> (i32, i32) {
    %c0_i32 = arith.constant 0 : i32
    %c0_i32_0 = arith.constant 0 : i32
    %c0_i32_1 = arith.constant 0 : i32
    return %c0_i32, %c0_i32_0 : i32, i32
  }
  func.func @transform_4(%arg0: i32) -> (i32, i32) {
    %c0_i32 = arith.constant 0 : i32
    %c0_i32_0 = arith.constant 0 : i32
    %c0_i32_1 = arith.constant 0 : i32
    return %c0_i32, %c0_i32_0 : i32, i32
  }
  func.func @transform_5(%arg0: i32) -> (i32, i32) {
    %c0_i32 = arith.constant 0 : i32
    %c0_i32_0 = arith.constant 0 : i32
    %c0_i32_1 = arith.constant 0 : i32
    return %c0_i32, %c0_i32_0 : i32, i32
  }
  func.func @transform_6(%arg0: i32) -> (i32, i32) {
    %c0_i32 = arith.constant 0 : i32
    %c0_i32_0 = arith.constant 0 : i32
    %c0_i32_1 = arith.constant 0 : i32
    return %c0_i32, %c0_i32_0 : i32, i32
  }
  func.func @transform_7(%arg0: i32) -> (i32, i32) {
    %c0_i32 = arith.constant 0 : i32
    %c0_i32_0 = arith.constant 0 : i32
    %c0_i32_1 = arith.constant 0 : i32
    return %c0_i32, %c0_i32_0 : i32, i32
  }
  func.func @transform_8(%arg0: i32) -> (i32, i32) {
    %c0_i32 = arith.constant 0 : i32
    %c0_i32_0 = arith.constant 0 : i32
    %c0_i32_1 = arith.constant 0 : i32
    return %c0_i32, %c0_i32_0 : i32, i32
  }
  func.func @transform_9(%arg0: i32) -> (i32, i32) {
    %c0_i32 = arith.constant 0 : i32
    %c0_i32_0 = arith.constant 0 : i32
    %c0_i32_1 = arith.constant 0 : i32
    return %c0_i32, %c0_i32_0 : i32, i32
  }
  func.func @transform_10(%arg0: i32) -> (i32, i32) {
    %c0_i32 = arith.constant 0 : i32
    %c0_i32_0 = arith.constant 0 : i32
    %c0_i32_1 = arith.constant 0 : i32
    return %c0_i32, %c0_i32_0 : i32, i32
  }
  func.func @transform_11(%arg0: i32) -> (i32, i32) {
    %c0_i32 = arith.constant 0 : i32
    %c0_i32_0 = arith.constant 0 : i32
    return %arg0, %c0_i32 : i32, i32
  }
}

</mosaic_0001>

<llo_original>
// kernel: tpu_custom_call.1
$region0: #{tpu_custom_call.1}
  #allocation0 [shape = 'u32[]', space=smem, size = 0x4, offset = 0x4, fixed_abs, tag = 'smem constant byte address 0x4 - core index']
  #allocation1 [shape = 'u32[72,128]{1,0:T(1,128)}', space=vmem, size = 0x9000, scoped, tag = 'internal scratch']
  %s0 = inlined_call_operand.vmem [shape: f32[256,16], index: 0, kind: input, shape index: {}]
  %s1 = inlined_call_operand.vmem [shape: f32[256,8], index: 1, kind: input, shape index: {}]
  %s2 = inlined_call_operand.vmem [shape: f32[16,256], index: 2, kind: input, shape index: {}]
  %s3 = inlined_call_operand.hbm [shape: f32[8,256], index: 3, kind: input, shape index: {}]
  %s4 = inlined_call_operand.hbm [shape: f32[1,256], index: 4, kind: input, shape index: {}]
  %s5 = inlined_call_operand.vmem [shape: f32[256,256], index: 5, kind: input, shape index: {}]
  %s6 = inlined_call_operand.vmem [shape: f32[1,256], index: 6, kind: input, shape index: {}]
  %s7 = inlined_call_operand.hbm [shape: f32[256,128], index: 7, kind: input, shape index: {}]
  %s8 = inlined_call_operand.vmem [shape: f32[1,128], index: 8, kind: input, shape index: {}]
  %s9 = inlined_call_operand.hbm [shape: f32[128,128], index: 9, kind: input, shape index: {}]
  %s10 = inlined_call_operand.vmem [shape: f32[1,128], index: 10, kind: input, shape index: {}]
  %s11 = inlined_call_operand.hbm [shape: f32[256,128], index: 11, kind: output, shape index: {}]
  %s12 = sld [smem:[#allocation0]]
  $region93: #{tpu_custom_call.1} parent=0
    _
  %s14 = ssub.s32 1, %s12
  %s15 = scalar_select 0, %s14, %s12
  $region1: #{tpu_custom_call.1} parent=0
    #allocation2 [shape = 'u8[8192]{0}', space=vmem, size = 0x2000, scoped, tag = 'input window, operand 3, single buffered']
    #allocation3 [shape = 's32[2]{0}', space=sflag, size = 0x8, scoped, tag = 'scoped memory for tpu_custom_call.1']
    #allocation4 [shape = 's32[2]{0}', space=sflag, size = 0x8, scoped, tag = 'scoped memory for tpu_custom_call.1']
    #allocation5 [shape = 'u8[1024]{0}', space=vmem, size = 0x400, scoped, tag = 'input window, operand 4, single buffered']
    #allocation6 [shape = 's32[1]{0}', space=sflag, size = 0x4, scoped, tag = 'scoped memory for tpu_custom_call.1']
    #allocation7 [shape = 'u8[131072]{0}', space=vmem, size = 0x20000, scoped, tag = 'input window, operand 7, single buffered']
    #allocation8 [shape = 'u8[65536]{0}', space=vmem, size = 0x10000, scoped, tag = 'input window, operand 9, single buffered']
    #allocation9 [shape = 's32[1]{0}', space=sflag, size = 0x4, scoped, tag = 'scoped memory for tpu_custom_call.1']
    #allocation10 [shape = 'u8[131072]{0}', space=vmem, size = 0x20000, scoped, tag = 'output window, operand 0']
    %16 = vsyncpa [#allocation3], 0
    %17 = vsyncpa [#allocation6], 0
    %18 = vsyncpa [#allocation9], 0
    %19 = vsyncpa [#allocation4], 0
    %s20 = scalar_lea.sflag [#allocation4], 1
    %21 = vsyncpa %s20, 0
    loop: start=0, step=1, limit=4
    $region2: #{tpu_custom_call.1} parent=1 // loop_pre_header
      _
    $region3: #{tpu_custom_call.1} parent=1 // loop_header
      %s23 = sphi 0, %s27
      %p24 = scmp.ge.s32.totalorder %s23, 4
      %s33 = sphi 0, %s35
      %s36 = sphi 0, %s33
      %s37 = sphi 0, %s36
      %s53 = sphi 0, %s37
      %s59 = sphi 0, %s61
      %s62 = sphi 0, %s59
      %s63 = sphi 0, %s62
      %s79 = sphi 0, %s63
      %s83 = sphi 0, %s83
      %s85 = sphi 0, %s83
      %s86 = sphi 0, %s85
      %s100 = sphi 0, %s86
      %s104 = sphi 0, %s104
      %s106 = sphi 0, %s104
      %s107 = sphi 0, %s106
      %s121 = sphi 0, %s107
      %s125 = sphi 0, %s125
      %s127 = sphi 0, %s125
      %s128 = sphi 0, %s127
      %s142 = sphi 0, %s128
      %s146 = sphi 0, %s146
      %s148 = sphi 0, %s146
      %s149 = sphi 0, %s148
      %s163 = sphi 0, %s149
      %s167 = sphi 0, %s167
      %s169 = sphi 0, %s167
      %s170 = sphi 0, %s169
      %s184 = sphi 0, %s170
      %s188 = sphi 0, %s188
      %s190 = sphi 0, %s188
      %s191 = sphi 0, %s190
      %s205 = sphi 0, %s191
      %s209 = sphi 0, %s209
      %s211 = sphi 0, %s209
      %s212 = sphi 0, %s211
      %s226 = sphi 0, %s212
      %s230 = sphi 0, %s230
      %s232 = sphi 0, %s230
      %s233 = sphi 0, %s232
      %s247 = sphi 0, %s233
      %s251 = sphi 0, %s251
      %s253 = sphi 0, %s251
      %s254 = sphi 0, %s253
      %s268 = sphi 0, %s254
      %s274 = sphi 0, %s276
      %s277 = sphi 0, %s274
      %s278 = sphi 0, %s277
      %s294 = sphi 0, %s278
    $region4: #{tpu_custom_call.1} parent=1 // loop_header_branch
      %26 = sbr.rel (%p24) target = $region8
    $region5: #{tpu_custom_call.1} parent=1 // loop_body
      %s28 = ssub.s32 %s23, 1
      %s29 = ssub.s32 %s23, 2
      %s30 = sadd.s32 %s23, 1
      %s31 = ssub.s32 %s23, %s30
      %p32 = scmp.eq.s32.totalorder %s31, 0
      %s34 = sadd.s32 %s33, 1
      %s35 = scalar_select %p32, %s33, %s34
      %p38 = pneg %p32
      %p39 = scmp.eq.s32.totalorder %s23, 1
      %p40 = por %p38, %p39
      %p41 = scmp.ne.s32.totalorder %s33, %s36
      %p42 = scmp.eq.s32.totalorder %s23, 0
      %p43 = por %p41, %p42
      %p44 = scmp.ne.s32.totalorder %s33, %s36
      %p45 = scmp.eq.s32.totalorder %s28, 1
      %p46 = por %p44, %p45
      %p47 = scmp.ne.s32.totalorder %s36, %s37
      %p48 = scmp.eq.s32.totalorder %s28, 0
      %p49 = por %p47, %p48
      %p50 = scmp.ne.s32.totalorder %s36, %s37
      %p51 = scmp.eq.s32.totalorder %s29, 1
      %p52 = por %p50, %p51
      %p54 = scmp.ne.s32.totalorder %s37, %s53
      %p55 = scmp.eq.s32.totalorder %s29, 0
      %p56 = por %p54, %p55
      %s57 = ssub.s32 %s23, %s30
      %p58 = scmp.eq.s32.totalorder %s57, 0
      %s60 = sadd.s32 %s59, 1
      %s61 = scalar_select %p58, %s59, %s60
      %p64 = pneg %p58
      %p65 = scmp.eq.s32.totalorder %s23, 1
      %p66 = por %p64, %p65
      %p67 = scmp.ne.s32.totalorder %s59, %s62
      %p68 = scmp.eq.s32.totalorder %s23, 0
      %p69 = por %p67, %p68
      %p70 = scmp.ne.s32.totalorder %s59, %s62
      %p71 = scmp.eq.s32.totalorder %s28, 1
      %p72 = por %p70, %p71
      %p73 = scmp.ne.s32.totalorder %s62, %s63
      %p74 = scmp.eq.s32.totalorder %s28, 0
      %p75 = por %p73, %p74
      %p76 = scmp.ne.s32.totalorder %s62, %s63
      %p77 = scmp.eq.s32.totalorder %s29, 1
      %p78 = por %p76, %p77
      %p80 = scmp.ne.s32.totalorder %s63, %s79
      %p81 = scmp.eq.s32.totalorder %s29, 0
      %p82 = por %p80, %p81
      %s84 = sadd.s32 %s83, 1
      %p87 = scmp.eq.s32.totalorder %s23, 1
      %p88 = scmp.ne.s32.totalorder %s83, %s85
      %p89 = scmp.eq.s32.totalorder %s23, 0
      %p90 = por %p88, %p89
      %p91 = scmp.ne.s32.totalorder %s83, %s85
      %p92 = scmp.eq.s32.totalorder %s28, 1
      %p93 = por %p91, %p92
      %p94 = scmp.ne.s32.totalorder %s85, %s86
      %p95 = scmp.eq.s32.totalorder %s28, 0
      %p96 = por %p94, %p95
      %p97 = scmp.ne.s32.totalorder %s85, %s86
      %p98 = scmp.eq.s32.totalorder %s29, 1
      %p99 = por %p97, %p98
      %p101 = scmp.ne.s32.totalorder %s86, %s100
      %p102 = scmp.eq.s32.totalorder %s29, 0
      %p103 = por %p101, %p102
      %s105 = sadd.s32 %s104, 1
      %p108 = scmp.eq.s32.totalorder %s23, 1
      %p109 = scmp.ne.s32.totalorder %s104, %s106
      %p110 = scmp.eq.s32.totalorder %s23, 0
      %p111 = por %p109, %p110
      %p112 = scmp.ne.s32.totalorder %s104, %s106
      %p113 = scmp.eq.s32.totalorder %s28, 1
      %p114 = por %p112, %p113
      %p115 = scmp.ne.s32.totalorder %s106, %s107
      %p116 = scmp.eq.s32.totalorder %s28, 0
      %p117 = por %p115, %p116
      %p118 = scmp.ne.s32.totalorder %s106, %s107
      %p119 = scmp.eq.s32.totalorder %s29, 1
      %p120 = por %p118, %p119
      %p122 = scmp.ne.s32.totalorder %s107, %s121
      %p123 = scmp.eq.s32.totalorder %s29, 0
      %p124 = por %p122, %p123
      %s126 = sadd.s32 %s125, 1
      %p129 = scmp.eq.s32.totalorder %s23, 1
      %p130 = scmp.ne.s32.totalorder %s125, %s127
      %p131 = scmp.eq.s32.totalorder %s23, 0
      %p132 = por %p130, %p131
      %p133 = scmp.ne.s32.totalorder %s125, %s127
      %p134 = scmp.eq.s32.totalorder %s28, 1
      %p135 = por %p133, %p134
      %p136 = scmp.ne.s32.totalorder %s127, %s128
      %p137 = scmp.eq.s32.totalorder %s28, 0
      %p138 = por %p136, %p137
      %p139 = scmp.ne.s32.totalorder %s127, %s128
      %p140 = scmp.eq.s32.totalorder %s29, 1
      %p141 = por %p139, %p140
      %p143 = scmp.ne.s32.totalorder %s128, %s142
      %p144 = scmp.eq.s32.totalorder %s29, 0
      %p145 = por %p143, %p144
      %s147 = sadd.s32 %s146, 1
      %p150 = scmp.eq.s32.totalorder %s23, 1
      %p151 = scmp.ne.s32.totalorder %s146, %s148
      %p152 = scmp.eq.s32.totalorder %s23, 0
      %p153 = por %p151, %p152
      %p154 = scmp.ne.s32.totalorder %s146, %s148
      %p155 = scmp.eq.s32.totalorder %s28, 1
      %p156 = por %p154, %p155
      %p157 = scmp.ne.s32.totalorder %s148, %s149
      %p158 = scmp.eq.s32.totalorder %s28, 0
      %p159 = por %p157, %p158
      %p160 = scmp.ne.s32.totalorder %s148, %s149
      %p161 = scmp.eq.s32.totalorder %s29, 1
      %p162 = por %p160, %p161
      %p164 = scmp.ne.s32.totalorder %s149, %s163
      %p165 = scmp.eq.s32.totalorder %s29, 0
      %p166 = por %p164, %p165
      %s168 = sadd.s32 %s167, 1
      %p171 = scmp.eq.s32.totalorder %s23, 1
      %p172 = scmp.ne.s32.totalorder %s167, %s169
      %p173 = scmp.eq.s32.totalorder %s23, 0
      %p174 = por %p172, %p173
      %p175 = scmp.ne.s32.totalorder %s167, %s169
      %p176 = scmp.eq.s32.totalorder %s28, 1
      %p177 = por %p175, %p176
      %p178 = scmp.ne.s32.totalorder %s169, %s170
      %p179 = scmp.eq.s32.totalorder %s28, 0
      %p180 = por %p178, %p179
      %p181 = scmp.ne.s32.totalorder %s169, %s170
      %p182 = scmp.eq.s32.totalorder %s29, 1
      %p183 = por %p181, %p182
      %p185 = scmp.ne.s32.totalorder %s170, %s184
      %p186 = scmp.eq.s32.totalorder %s29, 0
      %p187 = por %p185, %p186
      %s189 = sadd.s32 %s188, 1
      %p192 = scmp.eq.s32.totalorder %s23, 1
      %p193 = scmp.ne.s32.totalorder %s188, %s190
      %p194 = scmp.eq.s32.totalorder %s23, 0
      %p195 = por %p193, %p194
      %p196 = scmp.ne.s32.totalorder %s188, %s190
      %p197 = scmp.eq.s32.totalorder %s28, 1
      %p198 = por %p196, %p197
      %p199 = scmp.ne.s32.totalorder %s190, %s191
      %p200 = scmp.eq.s32.totalorder %s28, 0
      %p201 = por %p199, %p200
      %p202 = scmp.ne.s32.totalorder %s190, %s191
      %p203 = scmp.eq.s32.totalorder %s29, 1
      %p204 = por %p202, %p203
      %p206 = scmp.ne.s32.totalorder %s191, %s205
      %p207 = scmp.eq.s32.totalorder %s29, 0
      %p208 = por %p206, %p207
      %s210 = sadd.s32 %s209, 1
      %p213 = scmp.eq.s32.totalorder %s23, 1
      %p214 = scmp.ne.s32.totalorder %s209, %s211
      %p215 = scmp.eq.s32.totalorder %s23, 0
      %p216 = por %p214, %p215
      %p217 = scmp.ne.s32.totalorder %s209, %s211
      %p218 = scmp.eq.s32.totalorder %s28, 1
      %p219 = por %p217, %p218
      %p220 = scmp.ne.s32.totalorder %s211, %s212
      %p221 = scmp.eq.s32.totalorder %s28, 0
      %p222 = por %p220, %p221
      %p223 = scmp.ne.s32.totalorder %s211, %s212
      %p224 = scmp.eq.s32.totalorder %s29, 1
      %p225 = por %p223, %p224
      %p227 = scmp.ne.s32.totalorder %s212, %s226
      %p228 = scmp.eq.s32.totalorder %s29, 0
      %p229 = por %p227, %p228
      %s231 = sadd.s32 %s230, 1
      %p234 = scmp.eq.s32.totalorder %s23, 1
      %p235 = scmp.ne.s32.totalorder %s230, %s232
      %p236 = scmp.eq.s32.totalorder %s23, 0
      %p237 = por %p235, %p236
      %p238 = scmp.ne.s32.totalorder %s230, %s232
      %p239 = scmp.eq.s32.totalorder %s28, 1
      %p240 = por %p238, %p239
      %p241 = scmp.ne.s32.totalorder %s232, %s233
      %p242 = scmp.eq.s32.totalorder %s28, 0
      %p243 = por %p241, %p242
      %p244 = scmp.ne.s32.totalorder %s232, %s233
      %p245 = scmp.eq.s32.totalorder %s29, 1
      %p246 = por %p244, %p245
      %p248 = scmp.ne.s32.totalorder %s233, %s247
      %p249 = scmp.eq.s32.totalorder %s29, 0
      %p250 = por %p248, %p249
      %s252 = sadd.s32 %s251, 1
      %p255 = scmp.eq.s32.totalorder %s23, 1
      %p256 = scmp.ne.s32.totalorder %s251, %s253
      %p257 = scmp.eq.s32.totalorder %s23, 0
      %p258 = por %p256, %p257
      %p259 = scmp.ne.s32.totalorder %s251, %s253
      %p260 = scmp.eq.s32.totalorder %s28, 1
      %p261 = por %p259, %p260
      %p262 = scmp.ne.s32.totalorder %s253, %s254
      %p263 = scmp.eq.s32.totalorder %s28, 0
      %p264 = por %p262, %p263
      %p265 = scmp.ne.s32.totalorder %s253, %s254
      %p266 = scmp.eq.s32.totalorder %s29, 1
      %p267 = por %p265, %p266
      %p269 = scmp.ne.s32.totalorder %s254, %s268
      %p270 = scmp.eq.s32.totalorder %s29, 0
      %p271 = por %p269, %p270
      %s272 = ssub.s32 %s23, %s30
      %p273 = scmp.eq.s32.totalorder %s272, 0
      %s275 = sadd.s32 %s274, 1
      %s276 = scalar_select %p273, %s274, %s275
      %p279 = pneg %p273
      %p280 = scmp.eq.s32.totalorder %s23, 1
      %p281 = por %p279, %p280
      %p282 = scmp.ne.s32.totalorder %s274, %s277
      %p283 = scmp.eq.s32.totalorder %s23, 0
      %p284 = por %p282, %p283
      %p285 = scmp.ne.s32.totalorder %s274, %s277
      %p286 = scmp.eq.s32.totalorder %s28, 1
      %p287 = por %p285, %p286
      %p288 = scmp.ne.s32.totalorder %s277, %s278
      %p289 = scmp.eq.s32.totalorder %s28, 0
      %p290 = por %p288, %p289
      %p291 = scmp.ne.s32.totalorder %s277, %s278
      %p292 = scmp.eq.s32.totalorder %s29, 1
      %p293 = por %p291, %p292
      %p295 = scmp.ne.s32.totalorder %s278, %s294
      %p296 = scmp.eq.s32.totalorder %s29, 0
      %p297 = por %p295, %p296
      %p298 = scmp.le.s32.totalorder 1, %s23
      %p299 = scmp.lt.s32.totalorder %s23, 3
      %p300 = pnand %p298, %p299
      %p301 = pneg %p300
      // Predicated region
      $region9: #{tpu_custom_call.1} parent=5 // pred_check
        _
      $region10: #{tpu_custom_call.1} parent=5 // pred_check_branch
        %303 = sbr.rel (%p300) target = $region12
      $region11: #{tpu_custom_call.1} parent=5 // pred_region
        %s304 = ssub.s32 %s23, 1
        // Predicated region
        $region13: #{tpu_custom_call.1} parent=11 // pred_check
          %p305 = pneg %p96
        $region14: #{tpu_custom_call.1} parent=11 // pred_check_branch
          %307 = sbr.rel (%p305) target = $region16
        $region15: #{tpu_custom_call.1} parent=11 // pred_region
          _
        $region16: #{tpu_custom_call.1} parent=11 // pred_fallthru
          _
        // Predicated region
        $region17: #{tpu_custom_call.1} parent=11 // pred_check
          %p308 = pneg %p117
        $region18: #{tpu_custom_call.1} parent=11 // pred_check_branch
          %310 = sbr.rel (%p308) target = $region20
        $region19: #{tpu_custom_call.1} parent=11 // pred_region
          %312 = vsyncadd [#allocation3], 0
          %s314 = sshll.u32 %s3, 4
          %s315 = int_to_ptr.hbm [resolvable:$true] %s314
          %s316 = sshll.u32 [#allocation2], 4
          %s317 = int_to_ptr.vmem [resolvable:$true] %s316
          %319 = dma.hbm_to_vmem [thread:$0]  %s315, 256, %s317, [#allocation3]
        $region20: #{tpu_custom_call.1} parent=11 // pred_fallthru
          _
        // Predicated region
        $region21: #{tpu_custom_call.1} parent=11 // pred_check
          %p320 = pneg %p138
        $region22: #{tpu_custom_call.1} parent=11 // pred_check_branch
          %322 = sbr.rel (%p320) target = $region24
        $region23: #{tpu_custom_call.1} parent=11 // pred_region
          %324 = vsyncadd [#allocation6], 0
          %s326 = sshll.u32 %s4, 4
          %s327 = int_to_ptr.hbm [resolvable:$true] %s326
          %s328 = sshll.u32 [#allocation5], 4
          %s329 = int_to_ptr.vmem [resolvable:$true] %s328
          %331 = dma.hbm_to_vmem [thread:$0]  %s327, 32, %s329, [#allocation6]
        $region24: #{tpu_custom_call.1} parent=11 // pred_fallthru
          _
        // Predicated region
        $region25: #{tpu_custom_call.1} parent=11 // pred_check
          %p332 = pneg %p159
        $region26: #{tpu_custom_call.1} parent=11 // pred_check_branch
          %334 = sbr.rel (%p332) target = $region28
        $region27: #{tpu_custom_call.1} parent=11 // pred_region
          _
        $region28: #{tpu_custom_call.1} parent=11 // pred_fallthru
          _
        // Predicated region
        $region29: #{tpu_custom_call.1} parent=11 // pred_check
          %p335 = pneg %p180
        $region30: #{tpu_custom_call.1} parent=11 // pred_check_branch
          %337 = sbr.rel (%p335) target = $region32
        $region31: #{tpu_custom_call.1} parent=11 // pred_region
          _
        $region32: #{tpu_custom_call.1} parent=11 // pred_fallthru
          _
        // Predicated region
        $region33: #{tpu_custom_call.1} parent=11 // pred_check
          %p338 = pneg %p201
        $region34: #{tpu_custom_call.1} parent=11 // pred_check_branch
          %340 = sbr.rel (%p338) target = $region36
        $region35: #{tpu_custom_call.1} parent=11 // pred_region
          %342 = vsyncadd [#allocation6], 0
          %s343 = sshll.u32 %s7, 4
          %s344 = int_to_ptr.hbm [resolvable:$true] %s343
          %s345 = sshll.u32 [#allocation7], 4
          %s346 = int_to_ptr.vmem [resolvable:$true] %s345
          %351 = dma.hbm_to_vmem [thread:$0]  %s344, 4096, %s346, [#allocation6], 128, 128, 8
        $region36: #{tpu_custom_call.1} parent=11 // pred_fallthru
          _
        // Predicated region
        $region37: #{tpu_custom_call.1} parent=11 // pred_check
          %p352 = pneg %p222
        $region38: #{tpu_custom_call.1} parent=11 // pred_check_branch
          %354 = sbr.rel (%p352) target = $region40
        $region39: #{tpu_custom_call.1} parent=11 // pred_region
          _
        $region40: #{tpu_custom_call.1} parent=11 // pred_fallthru
          _
        // Predicated region
        $region41: #{tpu_custom_call.1} parent=11 // pred_check
          %p355 = pneg %p243
        $region42: #{tpu_custom_call.1} parent=11 // pred_check_branch
          %357 = sbr.rel (%p355) target = $region44
        $region43: #{tpu_custom_call.1} parent=11 // pred_region
          %359 = vsyncadd [#allocation9], 0
          %s360 = sshll.u32 %s9, 4
          %s361 = int_to_ptr.hbm [resolvable:$true] %s360
          %s362 = sshll.u32 [#allocation8], 4
          %s363 = int_to_ptr.vmem [resolvable:$true] %s362
          %368 = dma.hbm_to_vmem [thread:$0]  %s361, 2048, %s363, [#allocation9], 128, 128, 8
        $region44: #{tpu_custom_call.1} parent=11 // pred_fallthru
          _
        // Predicated region
        $region45: #{tpu_custom_call.1} parent=11 // pred_check
          %p369 = pneg %p264
        $region46: #{tpu_custom_call.1} parent=11 // pred_check_branch
          %371 = sbr.rel (%p369) target = $region48
        $region47: #{tpu_custom_call.1} parent=11 // pred_region
          _
        $region48: #{tpu_custom_call.1} parent=11 // pred_fallthru
          _
      $region12: #{tpu_custom_call.1} parent=5 // pred_fallthru
        _
      %p372 = scmp.lt.s32.totalorder %s23, 2
      // Predicated region
      $region49: #{tpu_custom_call.1} parent=5 // pred_check
        %p373 = pneg %p372
      $region50: #{tpu_custom_call.1} parent=5 // pred_check_branch
        %375 = sbr.rel (%p373) target = $region52
      $region51: #{tpu_custom_call.1} parent=5 // pred_region
        // Predicated region
        $region53: #{tpu_custom_call.1} parent=51 // pred_check
          %p376 = pneg %p43
        $region54: #{tpu_custom_call.1} parent=51 // pred_check_branch
          %378 = sbr.rel (%p376) target = $region56
        $region55: #{tpu_custom_call.1} parent=51 // pred_region
          %s379 = smul.u32 16, %s23
          %p380 = scmp.lt.s32.totalorder %s379, 31
          %s381 = scalar_select %p380, %s379, 31
          %s382 = smul.addr %s381, 8
          %s383 = scalar_lea.vmem %s0, %s382
          %s384 = smul.u32 16, %s23
        $region56: #{tpu_custom_call.1} parent=51 // pred_fallthru
          _
        // Predicated region
        $region57: #{tpu_custom_call.1} parent=51 // pred_check
          %p385 = pneg %p69
        $region58: #{tpu_custom_call.1} parent=51 // pred_check_branch
          %387 = sbr.rel (%p385) target = $region60
        $region59: #{tpu_custom_call.1} parent=51 // pred_region
          %s388 = smul.u32 16, %s23
          %p389 = scmp.lt.s32.totalorder %s388, 31
          %s390 = scalar_select %p389, %s388, 31
          %s391 = smul.addr %s390, 8
          %s392 = scalar_lea.vmem %s1, %s391
          %s393 = smul.u32 16, %s23
        $region60: #{tpu_custom_call.1} parent=51 // pred_fallthru
          _
      $region52: #{tpu_custom_call.1} parent=5 // pred_fallthru
        _
      %p394 = scmp.le.s32.totalorder 1, %s23
      %p395 = scmp.lt.s32.totalorder %s23, 3
      %p396 = pnand %p394, %p395
      %p397 = pneg %p396
      // Predicated region
      $region61: #{tpu_custom_call.1} parent=5 // pred_check
        _
      $region62: #{tpu_custom_call.1} parent=5 // pred_check_branch
        %399 = sbr.rel (%p396) target = $region64
      $region63: #{tpu_custom_call.1} parent=5 // pred_region
        %s400 = ssub.s32 %s23, 1
        // Predicated region
        $region65: #{tpu_custom_call.1} parent=63 // pred_check
          %p401 = pneg %p117
        $region66: #{tpu_custom_call.1} parent=63 // pred_check_branch
          %403 = sbr.rel (%p401) target = $region68
        $region67: #{tpu_custom_call.1} parent=63 // pred_region
          %405 = dma.done [#allocation3], 256
        $region68: #{tpu_custom_call.1} parent=63 // pred_fallthru
          _
        // Predicated region
        $region69: #{tpu_custom_call.1} parent=63 // pred_check
          %p406 = pneg %p138
        $region70: #{tpu_custom_call.1} parent=63 // pred_check_branch
          %408 = sbr.rel (%p406) target = $region72
        $region71: #{tpu_custom_call.1} parent=63 // pred_region
          %410 = dma.done [#allocation6], 32
        $region72: #{tpu_custom_call.1} parent=63 // pred_fallthru
          _
        // Predicated region
        $region73: #{tpu_custom_call.1} parent=63 // pred_check
          %p411 = pneg %p201
        $region74: #{tpu_custom_call.1} parent=63 // pred_check_branch
          %413 = sbr.rel (%p411) target = $region76
        $region75: #{tpu_custom_call.1} parent=63 // pred_region
          %415 = dma.done [#allocation6], 4096
        $region76: #{tpu_custom_call.1} parent=63 // pred_fallthru
          _
        // Predicated region
        $region77: #{tpu_custom_call.1} parent=63 // pred_check
          %p416 = pneg %p243
        $region78: #{tpu_custom_call.1} parent=63 // pred_check_branch
          %418 = sbr.rel (%p416) target = $region80
        $region79: #{tpu_custom_call.1} parent=63 // pred_region
          %420 = dma.done [#allocation9], 2048
        $region80: #{tpu_custom_call.1} parent=63 // pred_fallthru
          _
        %s421 = smul.u32 16, %s28
        %p422 = scmp.lt.s32.totalorder %s421, 31
        %s423 = scalar_select %p422, %s421, 31
        %s424 = smul.addr %s423, 8
        %s425 = scalar_lea.vmem %s0, %s424
        %p426 = pneg %p49
        %p427 = pneg %p46
        %s428 = smul.u32 16, %s28
        %p429 = scmp.lt.s32.totalorder %s428, 31
        %s430 = scalar_select %p429, %s428, 31
        %s431 = smul.addr %s430, 8
        %s432 = scalar_lea.vmem %s1, %s431
        %p433 = pneg %p75
        %p434 = pneg %p72
        %p435 = pneg %p96
        %p436 = pneg %p93
        %p437 = pneg %p117
        %p438 = pneg %p114
        %p439 = pneg %p138
        %p440 = pneg %p135
        %p441 = pneg %p159
        %p442 = pneg %p156
        %p443 = pneg %p180
        %p444 = pneg %p177
        %p445 = pneg %p201
        %p446 = pneg %p198
        %p447 = pneg %p222
        %p448 = pneg %p219
        %p449 = pneg %p243
        %p450 = pneg %p240
        %p451 = pneg %p264
        %p452 = pneg %p261
        %p453 = pneg %p290
        %p454 = pneg %p287
        %s455 = sand.u32 %s277, 1
        %s456 = scalar_lea.sflag [#allocation4], %s455
        %s457 = sand.u32 %s277, 1
        %s458 = smul.addr %s457, 128
        %s459 = scalar_lea.vmem [#allocation10], %s458
        %s460 = smul.u32 16, %s28
        %p461 = scmp.lt.s32.totalorder %s460, 31
        %s462 = scalar_select %p461, %s460, 31
        %s463 = smul.addr %s462, 8
        %s464 = scalar_lea.vmem %s0, %s463
        %s465 = smul.u32 16, %s28
        %s466 = smul.u32 16, %s28
        %p467 = scmp.lt.s32.totalorder %s466, 31
        %s468 = scalar_select %p467, %s466, 31
        %s469 = smul.addr %s468, 8
        %s470 = scalar_lea.vmem %s1, %s469
        %s471 = smul.u32 16, %s28
        %s472 = smul.u32 16, %s28
        %v473 = vld [vmem:[%s464] sm:$0xff]
        %v474 = vld [vmem:[%s464 + $0x8] sm:$0xff]
        %v475 = vld [vmem:[%s464 + $0x10] sm:$0xff]
        %v476 = vld [vmem:[%s464 + $0x18] sm:$0xff]
        %v477 = vld [vmem:[%s464 + $0x20] sm:$0xff]
        %v478 = vld [vmem:[%s464 + $0x28] sm:$0xff]
        %v479 = vld [vmem:[%s464 + $0x30] sm:$0xff]
        %v480 = vld [vmem:[%s464 + $0x38] sm:$0xff]
        %v481 = vld [vmem:[%s464 + $0x40] sm:$0xff]
        %v482 = vld [vmem:[%s464 + $0x48] sm:$0xff]
        %v483 = vld [vmem:[%s464 + $0x50] sm:$0xff]
        %v484 = vld [vmem:[%s464 + $0x58] sm:$0xff]
        %v485 = vld [vmem:[%s464 + $0x60] sm:$0xff]
        %v486 = vld [vmem:[%s464 + $0x68] sm:$0xff]
        %v487 = vld [vmem:[%s464 + $0x70] sm:$0xff]
        %v488 = vld [vmem:[%s464 + $0x78] sm:$0xff]
        %v489 = vld [vmem:[%s470] sm:$0xff]
        %v490 = vld [vmem:[%s470 + $0x8] sm:$0xff]
        %v491 = vld [vmem:[%s470 + $0x10] sm:$0xff]
        %v492 = vld [vmem:[%s470 + $0x18] sm:$0xff]
        %v493 = vld [vmem:[%s470 + $0x20] sm:$0xff]
        %v494 = vld [vmem:[%s470 + $0x28] sm:$0xff]
        %v495 = vld [vmem:[%s470 + $0x30] sm:$0xff]
        %v496 = vld [vmem:[%s470 + $0x38] sm:$0xff]
        %v497 = vld [vmem:[%s470 + $0x40] sm:$0xff]
        %v498 = vld [vmem:[%s470 + $0x48] sm:$0xff]
        %v499 = vld [vmem:[%s470 + $0x50] sm:$0xff]
        %v500 = vld [vmem:[%s470 + $0x58] sm:$0xff]
        %v501 = vld [vmem:[%s470 + $0x60] sm:$0xff]
        %v502 = vld [vmem:[%s470 + $0x68] sm:$0xff]
        %v503 = vld [vmem:[%s470 + $0x70] sm:$0xff]
        %v504 = vld [vmem:[%s470 + $0x78] sm:$0xff]
        %v505 = vld [vmem:[%s2] sm:$0xff]
        %v506 = vld [vmem:[%s2 + $0x8] sm:$0xff]
        %v507 = vld [vmem:[%s2 + $0x10] sm:$0xff]
        %v508 = vld [vmem:[%s2 + $0x18] sm:$0xff]
        %v509 = vld [vmem:[#allocation2] sm:$0xff]
        %v510 = vld [vmem:[#allocation2 + $0x8] sm:$0xff]
        %vm511 = vcmask 64512
        %v513 = vsel %vm511, %v489, 0
        %v516 = vsel %vm511, %v490, 0
        %v519 = vsel %vm511, %v491, 0
        %v522 = vsel %vm511, %v492, 0
        %v525 = vsel %vm511, %v493, 0
        %v528 = vsel %vm511, %v494, 0
        %v531 = vsel %vm511, %v495, 0
        %v534 = vsel %vm511, %v496, 0
        %v537 = vsel %vm511, %v497, 0
        %v540 = vsel %vm511, %v498, 0
        %v543 = vsel %vm511, %v499, 0
        %v546 = vsel %vm511, %v500, 0
        %v549 = vsel %vm511, %v501, 0
        %v552 = vsel %vm511, %v502, 0
        %v555 = vsel %vm511, %v503, 0
        %v558 = vsel %vm511, %v504, 0
        %560 = vmatpush.msra.mxu0 0.0
        %561 = vmatpush.msra.mxu0 0.0
        %562 = vmatpush.msra.mxu0 0.0
        %563 = vmatpush.msra.mxu0 0.0
        %564 = vmatpush.msra.mxu0 0.0
        %565 = vmatpush.msra.mxu0 0.0
        %566 = vmatpush.msra.mxu0 0.0
        %567 = vmatpush.msra.mxu0 0.0
        %568 = vmatpush.msra.mxu0 0.0
        %569 = vmatpush.msra.mxu0 0.0
        %570 = vmatpush.msra.mxu0 0.0
        %571 = vmatpush.msra.mxu0 0.0
        %572 = vmatpush.msra.mxu0 0.0
        %573 = vmatpush.msra.mxu0 0.0
        %574 = vmatpush.msra.mxu0 0.0
        %575 = vmatpush.msra.mxu0 %v509
        %576 = vmatmul.f32.gmra.mxu0 %v513
        %v577 = vpop.f32.mrf.mxu0
        %v578 = vadd.f32 0.0, %v577
        %579 = vmatmul.f32.gmra.mxu0 %v516
        %v580 = vpop.f32.mrf.mxu0
        %v581 = vadd.f32 0.0, %v580
        %582 = vmatmul.f32.gmra.mxu0 %v519
        %v583 = vpop.f32.mrf.mxu0
        %v584 = vadd.f32 0.0, %v583
        %585 = vmatmul.f32.gmra.mxu0 %v522
        %v586 = vpop.f32.mrf.mxu0
        %v587 = vadd.f32 0.0, %v586
        %588 = vmatmul.f32.gmra.mxu0 %v525
        %v589 = vpop.f32.mrf.mxu0
        %v590 = vadd.f32 0.0, %v589
        %591 = vmatmul.f32.gmra.mxu0 %v528
        %v592 = vpop.f32.mrf.mxu0
        %v593 = vadd.f32 0.0, %v592
        %594 = vmatmul.f32.gmra.mxu0 %v531
        %v595 = vpop.f32.mrf.mxu0
        %v596 = vadd.f32 0.0, %v595
        %597 = vmatmul.f32.gmra.mxu0 %v534
        %v598 = vpop.f32.mrf.mxu0
        %v599 = vadd.f32 0.0, %v598
        %600 = vmatmul.f32.gmra.mxu0 %v537
        %v601 = vpop.f32.mrf.mxu0
        %v602 = vadd.f32 0.0, %v601
        %603 = vmatmul.f32.gmra.mxu0 %v540
        %v604 = vpop.f32.mrf.mxu0
        %v605 = vadd.f32 0.0, %v604
        %606 = vmatmul.f32.gmra.mxu0 %v543
        %v607 = vpop.f32.mrf.mxu0
        %v608 = vadd.f32 0.0, %v607
        %609 = vmatmul.f32.gmra.mxu0 %v546
        %v610 = vpop.f32.mrf.mxu0
        %v611 = vadd.f32 0.0, %v610
        %612 = vmatmul.f32.gmra.mxu0 %v549
        %v613 = vpop.f32.mrf.mxu0
        %v614 = vadd.f32 0.0, %v613
        %615 = vmatmul.f32.gmra.mxu0 %v552
        %v616 = vpop.f32.mrf.mxu0
        %v617 = vadd.f32 0.0, %v616
        %618 = vmatmul.f32.gmra.mxu0 %v555
        %v619 = vpop.f32.mrf.mxu0
        %v620 = vadd.f32 0.0, %v619
        %621 = vmatmul.f32.gmra.mxu0 %v558
        %v622 = vpop.f32.mrf.mxu0
        %v623 = vadd.f32 0.0, %v622
        %624 = vdwg.mxu0
        %625 = vmatpush.msra.mxu0 0.0
        %626 = vmatpush.msra.mxu0 0.0
        %627 = vmatpush.msra.mxu0 0.0
        %628 = vmatpush.msra.mxu0 0.0
        %629 = vmatpush.msra.mxu0 0.0
        %630 = vmatpush.msra.mxu0 0.0
        %631 = vmatpush.msra.mxu0 0.0
        %632 = vmatpush.msra.mxu0 0.0
        %633 = vmatpush.msra.mxu0 0.0
        %634 = vmatpush.msra.mxu0 0.0
        %635 = vmatpush.msra.mxu0 0.0
        %636 = vmatpush.msra.mxu0 0.0
        %637 = vmatpush.msra.mxu0 0.0
        %638 = vmatpush.msra.mxu0 0.0
        %639 = vmatpush.msra.mxu0 0.0
        %640 = vmatpush.msra.mxu0 %v510
        %641 = vmatmul.f32.gmra.mxu0 %v513
        %v642 = vpop.f32.mrf.mxu0
        %v643 = vadd.f32 0.0, %v642
        %644 = vmatmul.f32.gmra.mxu0 %v516
        %v645 = vpop.f32.mrf.mxu0
        %v646 = vadd.f32 0.0, %v645
        %647 = vmatmul.f32.gmra.mxu0 %v519
        %v648 = vpop.f32.mrf.mxu0
        %v649 = vadd.f32 0.0, %v648
        %650 = vmatmul.f32.gmra.mxu0 %v522
        %v651 = vpop.f32.mrf.mxu0
        %v652 = vadd.f32 0.0, %v651
        %653 = vmatmul.f32.gmra.mxu0 %v525
        %v654 = vpop.f32.mrf.mxu0
        %v655 = vadd.f32 0.0, %v654
        %656 = vmatmul.f32.gmra.mxu0 %v528
        %v657 = vpop.f32.mrf.mxu0
        %v658 = vadd.f32 0.0, %v657
        %659 = vmatmul.f32.gmra.mxu0 %v531
        %v660 = vpop.f32.mrf.mxu0
        %v661 = vadd.f32 0.0, %v660
        %662 = vmatmul.f32.gmra.mxu0 %v534
        %v663 = vpop.f32.mrf.mxu0
        %v664 = vadd.f32 0.0, %v663
        %665 = vmatmul.f32.gmra.mxu0 %v537
        %v666 = vpop.f32.mrf.mxu0
        %v667 = vadd.f32 0.0, %v666
        %668 = vmatmul.f32.gmra.mxu0 %v540
        %v669 = vpop.f32.mrf.mxu0
        %v670 = vadd.f32 0.0, %v669
        %671 = vmatmul.f32.gmra.mxu0 %v543
        %v672 = vpop.f32.mrf.mxu0
        %v673 = vadd.f32 0.0, %v672
        %674 = vmatmul.f32.gmra.mxu0 %v546
        %v675 = vpop.f32.mrf.mxu0
        %v676 = vadd.f32 0.0, %v675
        %677 = vmatmul.f32.gmra.mxu0 %v549
        %v678 = vpop.f32.mrf.mxu0
        %v679 = vadd.f32 0.0, %v678
        %680 = vmatmul.f32.gmra.mxu0 %v552
        %v681 = vpop.f32.mrf.mxu0
        %v682 = vadd.f32 0.0, %v681
        %683 = vmatmul.f32.gmra.mxu0 %v555
        %v684 = vpop.f32.mrf.mxu0
        %v685 = vadd.f32 0.0, %v684
        %686 = vmatmul.f32.gmra.mxu0 %v558
        %v687 = vpop.f32.mrf.mxu0
        %v688 = vadd.f32 0.0, %v687
        %689 = vdwg.mxu0
        %vm690 = vcmask 130048
        %v692 = vsel %vm690, %v473, 0
        %v695 = vsel %vm690, %v474, 0
        %v698 = vsel %vm690, %v475, 0
        %v701 = vsel %vm690, %v476, 0
        %v704 = vsel %vm690, %v477, 0
        %v707 = vsel %vm690, %v478, 0
        %v710 = vsel %vm690, %v479, 0
        %v713 = vsel %vm690, %v480, 0
        %v716 = vsel %vm690, %v481, 0
        %v719 = vsel %vm690, %v482, 0
        %v722 = vsel %vm690, %v483, 0
        %v725 = vsel %vm690, %v484, 0
        %v728 = vsel %vm690, %v485, 0
        %v731 = vsel %vm690, %v486, 0
        %v734 = vsel %vm690, %v487, 0
        %v737 = vsel %vm690, %v488, 0
        %739 = vmatpush.msra.mxu0 0.0
        %740 = vmatpush.msra.mxu0 0.0
        %741 = vmatpush.msra.mxu0 0.0
        %742 = vmatpush.msra.mxu0 0.0
        %743 = vmatpush.msra.mxu0 0.0
        %744 = vmatpush.msra.mxu0 0.0
        %745 = vmatpush.msra.mxu0 0.0
        %746 = vmatpush.msra.mxu0 0.0
        %747 = vmatpush.msra.mxu0 0.0
        %748 = vmatpush.msra.mxu0 0.0
        %749 = vmatpush.msra.mxu0 0.0
        %750 = vmatpush.msra.mxu0 0.0
        %751 = vmatpush.msra.mxu0 0.0
        %752 = vmatpush.msra.mxu0 0.0
        %753 = vmatpush.msra.mxu0 %v507
        %754 = vmatpush.msra.mxu0 %v505
        %755 = vmatmul.f32.gmra.mxu0 %v692
        %v756 = vpop.f32.mrf.mxu0
        %v757 = vadd.f32 %v578, %v756
        %758 = vmatmul.f32.gmra.mxu0 %v695
        %v759 = vpop.f32.mrf.mxu0
        %v760 = vadd.f32 %v581, %v759
        %761 = vmatmul.f32.gmra.mxu0 %v698
        %v762 = vpop.f32.mrf.mxu0
        %v763 = vadd.f32 %v584, %v762
        %764 = vmatmul.f32.gmra.mxu0 %v701
        %v765 = vpop.f32.mrf.mxu0
        %v766 = vadd.f32 %v587, %v765
        %767 = vmatmul.f32.gmra.mxu0 %v704
        %v768 = vpop.f32.mrf.mxu0
        %v769 = vadd.f32 %v590, %v768
        %770 = vmatmul.f32.gmra.mxu0 %v707
        %v771 = vpop.f32.mrf.mxu0
        %v772 = vadd.f32 %v593, %v771
        %773 = vmatmul.f32.gmra.mxu0 %v710
        %v774 = vpop.f32.mrf.mxu0
        %v775 = vadd.f32 %v596, %v774
        %776 = vmatmul.f32.gmra.mxu0 %v713
        %v777 = vpop.f32.mrf.mxu0
        %v778 = vadd.f32 %v599, %v777
        %779 = vmatmul.f32.gmra.mxu0 %v716
        %v780 = vpop.f32.mrf.mxu0
        %v781 = vadd.f32 %v602, %v780
        %782 = vmatmul.f32.gmra.mxu0 %v719
        %v783 = vpop.f32.mrf.mxu0
        %v784 = vadd.f32 %v605, %v783
        %785 = vmatmul.f32.gmra.mxu0 %v722
        %v786 = vpop.f32.mrf.mxu0
        %v787 = vadd.f32 %v608, %v786
        %788 = vmatmul.f32.gmra.mxu0 %v725
        %v789 = vpop.f32.mrf.mxu0
        %v790 = vadd.f32 %v611, %v789
        %791 = vmatmul.f32.gmra.mxu0 %v728
        %v792 = vpop.f32.mrf.mxu0
        %v793 = vadd.f32 %v614, %v792
        %794 = vmatmul.f32.gmra.mxu0 %v731
        %v795 = vpop.f32.mrf.mxu0
        %v796 = vadd.f32 %v617, %v795
        %797 = vmatmul.f32.gmra.mxu0 %v734
        %v798 = vpop.f32.mrf.mxu0
        %v799 = vadd.f32 %v620, %v798
        %800 = vmatmul.f32.gmra.mxu0 %v737
        %v801 = vpop.f32.mrf.mxu0
        %v802 = vadd.f32 %v623, %v801
        %803 = vdwg.mxu0
        %804 = vmatpush.msra.mxu0 0.0
        %805 = vmatpush.msra.mxu0 0.0
        %806 = vmatpush.msra.mxu0 0.0
        %807 = vmatpush.msra.mxu0 0.0
        %808 = vmatpush.msra.mxu0 0.0
        %809 = vmatpush.msra.mxu0 0.0
        %810 = vmatpush.msra.mxu0 0.0
        %811 = vmatpush.msra.mxu0 0.0
        %812 = vmatpush.msra.mxu0 0.0
        %813 = vmatpush.msra.mxu0 0.0
        %814 = vmatpush.msra.mxu0 0.0
        %815 = vmatpush.msra.mxu0 0.0
        %816 = vmatpush.msra.mxu0 0.0
        %817 = vmatpush.msra.mxu0 0.0
        %818 = vmatpush.msra.mxu0 %v508
        %819 = vmatpush.msra.mxu0 %v506
        %820 = vmatmul.f32.gmra.mxu0 %v692
        %v821 = vpop.f32.mrf.mxu0
        %v822 = vadd.f32 %v643, %v821
        %823 = vmatmul.f32.gmra.mxu0 %v695
        %v824 = vpop.f32.mrf.mxu0
        %v825 = vadd.f32 %v646, %v824
        %826 = vmatmul.f32.gmra.mxu0 %v698
        %v827 = vpop.f32.mrf.mxu0
        %v828 = vadd.f32 %v649, %v827
        %829 = vmatmul.f32.gmra.mxu0 %v701
        %v830 = vpop.f32.mrf.mxu0
        %v831 = vadd.f32 %v652, %v830
        %832 = vmatmul.f32.gmra.mxu0 %v704
        %v833 = vpop.f32.mrf.mxu0
        %v834 = vadd.f32 %v655, %v833
        %835 = vmatmul.f32.gmra.mxu0 %v707
        %v836 = vpop.f32.mrf.mxu0
        %v837 = vadd.f32 %v658, %v836
        %838 = vmatmul.f32.gmra.mxu0 %v710
        %v839 = vpop.f32.mrf.mxu0
        %v840 = vadd.f32 %v661, %v839
        %841 = vmatmul.f32.gmra.mxu0 %v713
        %v842 = vpop.f32.mrf.mxu0
        %v843 = vadd.f32 %v664, %v842
        %844 = vmatmul.f32.gmra.mxu0 %v716
        %v845 = vpop.f32.mrf.mxu0
        %v846 = vadd.f32 %v667, %v845
        %847 = vmatmul.f32.gmra.mxu0 %v719
        %v848 = vpop.f32.mrf.mxu0
        %v849 = vadd.f32 %v670, %v848
        %850 = vmatmul.f32.gmra.mxu0 %v722
        %v851 = vpop.f32.mrf.mxu0
        %v852 = vadd.f32 %v673, %v851
        %853 = vmatmul.f32.gmra.mxu0 %v725
        %v854 = vpop.f32.mrf.mxu0
        %v855 = vadd.f32 %v676, %v854
        %856 = vmatmul.f32.gmra.mxu0 %v728
        %v857 = vpop.f32.mrf.mxu0
        %v858 = vadd.f32 %v679, %v857
        %859 = vmatmul.f32.gmra.mxu0 %v731
        %v860 = vpop.f32.mrf.mxu0
        %v861 = vadd.f32 %v682, %v860
        %862 = vmatmul.f32.gmra.mxu0 %v734
        %v863 = vpop.f32.mrf.mxu0
        %v864 = vadd.f32 %v685, %v863
        %865 = vmatmul.f32.gmra.mxu0 %v737
        %v866 = vpop.f32.mrf.mxu0
        %v867 = vadd.f32 %v688, %v866
        %868 = vdwg.mxu0
        %v869 = vld [vmem:[#allocation5] sm:$0x3]
        %v871 = vperm.slane %v869, 0
        %v872 = vperm.slane %v869, 1
        %v875 = vadd.f32 %v757, %v871
        %v876 = vadd.f32 %v822, %v872
        %v877 = vadd.f32 %v760, %v871
        %v878 = vadd.f32 %v825, %v872
        %v879 = vadd.f32 %v763, %v871
        %v880 = vadd.f32 %v828, %v872
        %v881 = vadd.f32 %v766, %v871
        %v882 = vadd.f32 %v831, %v872
        %v883 = vadd.f32 %v769, %v871
        %v884 = vadd.f32 %v834, %v872
        %v885 = vadd.f32 %v772, %v871
        %v886 = vadd.f32 %v837, %v872
        %v887 = vadd.f32 %v775, %v871
        %v888 = vadd.f32 %v840, %v872
        %v889 = vadd.f32 %v778, %v871
        %v890 = vadd.f32 %v843, %v872
        %v891 = vadd.f32 %v781, %v871
        %v892 = vadd.f32 %v846, %v872
        %v893 = vadd.f32 %v784, %v871
        %v894 = vadd.f32 %v849, %v872
        %v895 = vadd.f32 %v787, %v871
        %v896 = vadd.f32 %v852, %v872
        %v897 = vadd.f32 %v790, %v871
        %v898 = vadd.f32 %v855, %v872
        %v899 = vadd.f32 %v793, %v871
        %v900 = vadd.f32 %v858, %v872
        %v901 = vadd.f32 %v796, %v871
        %v902 = vadd.f32 %v861, %v872
        %v903 = vadd.f32 %v799, %v871
        %v904 = vadd.f32 %v864, %v872
        %v905 = vadd.f32 %v802, %v871
        %v906 = vadd.f32 %v867, %v872
        %v907 = vmax.f32 %v875, 0.0
        %v908 = vmax.f32 %v876, 0.0
        %v909 = vmax.f32 %v877, 0.0
        %v910 = vmax.f32 %v878, 0.0
        %v911 = vmax.f32 %v879, 0.0
        %v912 = vmax.f32 %v880, 0.0
        %v913 = vmax.f32 %v881, 0.0
        %v914 = vmax.f32 %v882, 0.0
        %v915 = vmax.f32 %v883, 0.0
        %v916 = vmax.f32 %v884, 0.0
        %v917 = vmax.f32 %v885, 0.0
        %v918 = vmax.f32 %v886, 0.0
        %v919 = vmax.f32 %v887, 0.0
        %v920 = vmax.f32 %v888, 0.0
        %v921 = vmax.f32 %v889, 0.0
        %v922 = vmax.f32 %v890, 0.0
        %v923 = vmax.f32 %v891, 0.0
        %v924 = vmax.f32 %v892, 0.0
        %v925 = vmax.f32 %v893, 0.0
        %v926 = vmax.f32 %v894, 0.0
        %v927 = vmax.f32 %v895, 0.0
        %v928 = vmax.f32 %v896, 0.0
        %v929 = vmax.f32 %v897, 0.0
        %v930 = vmax.f32 %v898, 0.0
        %v931 = vmax.f32 %v899, 0.0
        %v932 = vmax.f32 %v900, 0.0
        %v933 = vmax.f32 %v901, 0.0
        %v934 = vmax.f32 %v902, 0.0
        %v935 = vmax.f32 %v903, 0.0
        %v936 = vmax.f32 %v904, 0.0
        %v937 = vmax.f32 %v905, 0.0
        %v938 = vmax.f32 %v906, 0.0
        %v939 = vld [vmem:[%s5] sm:$0xff]
        %v940 = vld [vmem:[%s5 + $0x8] sm:$0xff]
        %v941 = vld [vmem:[%s5 + $0x10] sm:$0xff]
        %v942 = vld [vmem:[%s5 + $0x18] sm:$0xff]
        %v943 = vld [vmem:[%s5 + $0x20] sm:$0xff]
        %v944 = vld [vmem:[%s5 + $0x28] sm:$0xff]
        %v945 = vld [vmem:[%s5 + $0x30] sm:$0xff]
        %v946 = vld [vmem:[%s5 + $0x38] sm:$0xff]
        %v947 = vld [vmem:[%s5 + $0x40] sm:$0xff]
        %v948 = vld [vmem:[%s5 + $0x48] sm:$0xff]
        %v949 = vld [vmem:[%s5 + $0x50] sm:$0xff]
        %v950 = vld [vmem:[%s5 + $0x58] sm:$0xff]
        %v951 = vld [vmem:[%s5 + $0x60] sm:$0xff]
        %v952 = vld [vmem:[%s5 + $0x68] sm:$0xff]
        %v953 = vld [vmem:[%s5 + $0x70] sm:$0xff]
        %v954 = vld [vmem:[%s5 + $0x78] sm:$0xff]
        %v955 = vld [vmem:[%s5 + $0x80] sm:$0xff]
        %v956 = vld [vmem:[%s5 + $0x88] sm:$0xff]
        %v957 = vld [vmem:[%s5 + $0x90] sm:$0xff]
        %v958 = vld [vmem:[%s5 + $0x98] sm:$0xff]
        %v959 = vld [vmem:[%s5 + $0xa0] sm:$0xff]
        %v960 = vld [vmem:[%s5 + $0xa8] sm:$0xff]
        %v961 = vld [vmem:[%s5 + $0xb0] sm:$0xff]
        %v962 = vld [vmem:[%s5 + $0xb8] sm:$0xff]
        %v963 = vld [vmem:[%s5 + $0xc0] sm:$0xff]
        %v964 = vld [vmem:[%s5 + $0xc8] sm:$0xff]
        %v965 = vld [vmem:[%s5 + $0xd0] sm:$0xff]
        %v966 = vld [vmem:[%s5 + $0xd8] sm:$0xff]
        %v967 = vld [vmem:[%s5 + $0xe0] sm:$0xff]
        %v968 = vld [vmem:[%s5 + $0xe8] sm:$0xff]
        %v969 = vld [vmem:[%s5 + $0xf0] sm:$0xff]
        %v970 = vld [vmem:[%s5 + $0xf8] sm:$0xff]
        %v971 = vld [vmem:[%s5 + $0x100] sm:$0xff]
        %v972 = vld [vmem:[%s5 + $0x108] sm:$0xff]
        %v973 = vld [vmem:[%s5 + $0x110] sm:$0xff]
        %v974 = vld [vmem:[%s5 + $0x118] sm:$0xff]
        %v975 = vld [vmem:[%s5 + $0x120] sm:$0xff]
        %v976 = vld [vmem:[%s5 + $0x128] sm:$0xff]
        %v977 = vld [vmem:[%s5 + $0x130] sm:$0xff]
        %v978 = vld [vmem:[%s5 + $0x138] sm:$0xff]
        %v979 = vld [vmem:[%s5 + $0x140] sm:$0xff]
        %v980 = vld [vmem:[%s5 + $0x148] sm:$0xff]
        %v981 = vld [vmem:[%s5 + $0x150] sm:$0xff]
        %v982 = vld [vmem:[%s5 + $0x158] sm:$0xff]
        %v983 = vld [vmem:[%s5 + $0x160] sm:$0xff]
        %v984 = vld [vmem:[%s5 + $0x168] sm:$0xff]
        %v985 = vld [vmem:[%s5 + $0x170] sm:$0xff]
        %v986 = vld [vmem:[%s5 + $0x178] sm:$0xff]
        %v987 = vld [vmem:[%s5 + $0x180] sm:$0xff]
        %v988 = vld [vmem:[%s5 + $0x188] sm:$0xff]
        %v989 = vld [vmem:[%s5 + $0x190] sm:$0xff]
        %v990 = vld [vmem:[%s5 + $0x198] sm:$0xff]
        %v991 = vld [vmem:[%s5 + $0x1a0] sm:$0xff]
        %v992 = vld [vmem:[%s5 + $0x1a8] sm:$0xff]
        %v993 = vld [vmem:[%s5 + $0x1b0] sm:$0xff]
        %v994 = vld [vmem:[%s5 + $0x1b8] sm:$0xff]
        %v995 = vld [vmem:[%s5 + $0x1c0] sm:$0xff]
        %v996 = vld [vmem:[%s5 + $0x1c8] sm:$0xff]
        %v997 = vld [vmem:[%s5 + $0x1d0] sm:$0xff]
        %v998 = vld [vmem:[%s5 + $0x1d8] sm:$0xff]
        %v999 = vld [vmem:[%s5 + $0x1e0] sm:$0xff]
        %v1000 = vld [vmem:[%s5 + $0x1e8] sm:$0xff]
        %v1001 = vld [vmem:[%s5 + $0x1f0] sm:$0xff]
        %v1002 = vld [vmem:[%s5 + $0x1f8] sm:$0xff]
        %v1003 = vld [vmem:[%s6] sm:$0x3]
        %v1005 = vperm.slane %v1003, 0
        %v1006 = vperm.slane %v1003, 1
        %1009 = vmatpush.msra.mxu0 %v969
        %1010 = vmatpush.msra.mxu0 %v967
        %1011 = vmatpush.msra.mxu0 %v965
        %1012 = vmatpush.msra.mxu0 %v963
        %1013 = vmatpush.msra.mxu0 %v961
        %1014 = vmatpush.msra.mxu0 %v959
        %1015 = vmatpush.msra.mxu0 %v957
        %1016 = vmatpush.msra.mxu0 %v955
        %1017 = vmatpush.msra.mxu0 %v953
        %1018 = vmatpush.msra.mxu0 %v951
        %1019 = vmatpush.msra.mxu0 %v949
        %1020 = vmatpush.msra.mxu0 %v947
        %1021 = vmatpush.msra.mxu0 %v945
        %1022 = vmatpush.msra.mxu0 %v943
        %1023 = vmatpush.msra.mxu0 %v941
        %1024 = vmatpush.msra.mxu0 %v939
        %1025 = vmatmul.f32.gmra.mxu0 %v907
        %v1026 = vpop.f32.mrf.mxu0
        %v1027 = vadd.f32 %v1005, %v1026
        %1028 = vmatmul.f32.gmra.mxu0 %v909
        %v1029 = vpop.f32.mrf.mxu0
        %v1030 = vadd.f32 %v1005, %v1029
        %1031 = vmatmul.f32.gmra.mxu0 %v911
        %v1032 = vpop.f32.mrf.mxu0
        %v1033 = vadd.f32 %v1005, %v1032
        %1034 = vmatmul.f32.gmra.mxu0 %v913
        %v1035 = vpop.f32.mrf.mxu0
        %v1036 = vadd.f32 %v1005, %v1035
        %1037 = vmatmul.f32.gmra.mxu0 %v915
        %v1038 = vpop.f32.mrf.mxu0
        %v1039 = vadd.f32 %v1005, %v1038
        %1040 = vmatmul.f32.gmra.mxu0 %v917
        %v1041 = vpop.f32.mrf.mxu0
        %v1042 = vadd.f32 %v1005, %v1041
        %1043 = vmatmul.f32.gmra.mxu0 %v919
        %v1044 = vpop.f32.mrf.mxu0
        %v1045 = vadd.f32 %v1005, %v1044
        %1046 = vmatmul.f32.gmra.mxu0 %v921
        %v1047 = vpop.f32.mrf.mxu0
        %v1048 = vadd.f32 %v1005, %v1047
        %1049 = vmatmul.f32.gmra.mxu0 %v923
        %v1050 = vpop.f32.mrf.mxu0
        %v1051 = vadd.f32 %v1005, %v1050
        %1052 = vmatmul.f32.gmra.mxu0 %v925
        %v1053 = vpop.f32.mrf.mxu0
        %v1054 = vadd.f32 %v1005, %v1053
        %1055 = vmatmul.f32.gmra.mxu0 %v927
        %v1056 = vpop.f32.mrf.mxu0
        %v1057 = vadd.f32 %v1005, %v1056
        %1058 = vmatmul.f32.gmra.mxu0 %v929
        %v1059 = vpop.f32.mrf.mxu0
        %v1060 = vadd.f32 %v1005, %v1059
        %1061 = vmatmul.f32.gmra.mxu0 %v931
        %v1062 = vpop.f32.mrf.mxu0
        %v1063 = vadd.f32 %v1005, %v1062
        %1064 = vmatmul.f32.gmra.mxu0 %v933
        %v1065 = vpop.f32.mrf.mxu0
        %v1066 = vadd.f32 %v1005, %v1065
        %1067 = vmatmul.f32.gmra.mxu0 %v935
        %v1068 = vpop.f32.mrf.mxu0
        %v1069 = vadd.f32 %v1005, %v1068
        %1070 = vmatmul.f32.gmra.mxu0 %v937
        %v1071 = vpop.f32.mrf.mxu0
        %v1072 = vadd.f32 %v1005, %v1071
        %1073 = vdwg.mxu0
        %1074 = vmatpush.msra.mxu0 %v1001
        %1075 = vmatpush.msra.mxu0 %v999
        %1076 = vmatpush.msra.mxu0 %v997
        %1077 = vmatpush.msra.mxu0 %v995
        %1078 = vmatpush.msra.mxu0 %v993
        %1079 = vmatpush.msra.mxu0 %v991
        %1080 = vmatpush.msra.mxu0 %v989
        %1081 = vmatpush.msra.mxu0 %v987
        %1082 = vmatpush.msra.mxu0 %v985
        %1083 = vmatpush.msra.mxu0 %v983
        %1084 = vmatpush.msra.mxu0 %v981
        %1085 = vmatpush.msra.mxu0 %v979
        %1086 = vmatpush.msra.mxu0 %v977
        %1087 = vmatpush.msra.mxu0 %v975
        %1088 = vmatpush.msra.mxu0 %v973
        %1089 = vmatpush.msra.mxu0 %v971
        %1090 = vmatmul.f32.gmra.mxu0 %v908
        %v1091 = vpop.f32.mrf.mxu0
        %v1092 = vadd.f32 %v1027, %v1091
        %1093 = vmatmul.f32.gmra.mxu0 %v910
        %v1094 = vpop.f32.mrf.mxu0
        %v1095 = vadd.f32 %v1030, %v1094
        %1096 = vmatmul.f32.gmra.mxu0 %v912
        %v1097 = vpop.f32.mrf.mxu0
        %v1098 = vadd.f32 %v1033, %v1097
        %1099 = vmatmul.f32.gmra.mxu0 %v914
        %v1100 = vpop.f32.mrf.mxu0
        %v1101 = vadd.f32 %v1036, %v1100
        %1102 = vmatmul.f32.gmra.mxu0 %v916
        %v1103 = vpop.f32.mrf.mxu0
        %v1104 = vadd.f32 %v1039, %v1103
        %1105 = vmatmul.f32.gmra.mxu0 %v918
        %v1106 = vpop.f32.mrf.mxu0
        %v1107 = vadd.f32 %v1042, %v1106
        %1108 = vmatmul.f32.gmra.mxu0 %v920
        %v1109 = vpop.f32.mrf.mxu0
        %v1110 = vadd.f32 %v1045, %v1109
        %1111 = vmatmul.f32.gmra.mxu0 %v922
        %v1112 = vpop.f32.mrf.mxu0
        %v1113 = vadd.f32 %v1048, %v1112
        %1114 = vmatmul.f32.gmra.mxu0 %v924
        %v1115 = vpop.f32.mrf.mxu0
        %v1116 = vadd.f32 %v1051, %v1115
        %1117 = vmatmul.f32.gmra.mxu0 %v926
        %v1118 = vpop.f32.mrf.mxu0
        %v1119 = vadd.f32 %v1054, %v1118
        %1120 = vmatmul.f32.gmra.mxu0 %v928
        %v1121 = vpop.f32.mrf.mxu0
        %v1122 = vadd.f32 %v1057, %v1121
        %1123 = vmatmul.f32.gmra.mxu0 %v930
        %v1124 = vpop.f32.mrf.mxu0
        %v1125 = vadd.f32 %v1060, %v1124
        %1126 = vmatmul.f32.gmra.mxu0 %v932
        %v1127 = vpop.f32.mrf.mxu0
        %v1128 = vadd.f32 %v1063, %v1127
        %1129 = vmatmul.f32.gmra.mxu0 %v934
        %v1130 = vpop.f32.mrf.mxu0
        %v1131 = vadd.f32 %v1066, %v1130
        %1132 = vmatmul.f32.gmra.mxu0 %v936
        %v1133 = vpop.f32.mrf.mxu0
        %v1134 = vadd.f32 %v1069, %v1133
        %1135 = vmatmul.f32.gmra.mxu0 %v938
        %v1136 = vpop.f32.mrf.mxu0
        %v1137 = vadd.f32 %v1072, %v1136
        %1138 = vdwg.mxu0
        %1139 = vmatpush.msra.mxu0 %v970
        %1140 = vmatpush.msra.mxu0 %v968
        %1141 = vmatpush.msra.mxu0 %v966
        %1142 = vmatpush.msra.mxu0 %v964
        %1143 = vmatpush.msra.mxu0 %v962
        %1144 = vmatpush.msra.mxu0 %v960
        %1145 = vmatpush.msra.mxu0 %v958
        %1146 = vmatpush.msra.mxu0 %v956
        %1147 = vmatpush.msra.mxu0 %v954
        %1148 = vmatpush.msra.mxu0 %v952
        %1149 = vmatpush.msra.mxu0 %v950
        %1150 = vmatpush.msra.mxu0 %v948
        %1151 = vmatpush.msra.mxu0 %v946
        %1152 = vmatpush.msra.mxu0 %v944
        %1153 = vmatpush.msra.mxu0 %v942
        %1154 = vmatpush.msra.mxu0 %v940
        %1155 = vmatmul.f32.gmra.mxu0 %v907
        %v1156 = vpop.f32.mrf.mxu0
        %v1157 = vadd.f32 %v1006, %v1156
        %1158 = vmatmul.f32.gmra.mxu0 %v909
        %v1159 = vpop.f32.mrf.mxu0
        %v1160 = vadd.f32 %v1006, %v1159
        %1161 = vmatmul.f32.gmra.mxu0 %v911
        %v1162 = vpop.f32.mrf.mxu0
        %v1163 = vadd.f32 %v1006, %v1162
        %1164 = vmatmul.f32.gmra.mxu0 %v913
        %v1165 = vpop.f32.mrf.mxu0
        %v1166 = vadd.f32 %v1006, %v1165
        %1167 = vmatmul.f32.gmra.mxu0 %v915
        %v1168 = vpop.f32.mrf.mxu0
        %v1169 = vadd.f32 %v1006, %v1168
        %1170 = vmatmul.f32.gmra.mxu0 %v917
        %v1171 = vpop.f32.mrf.mxu0
        %v1172 = vadd.f32 %v1006, %v1171
        %1173 = vmatmul.f32.gmra.mxu0 %v919
        %v1174 = vpop.f32.mrf.mxu0
        %v1175 = vadd.f32 %v1006, %v1174
        %1176 = vmatmul.f32.gmra.mxu0 %v921
        %v1177 = vpop.f32.mrf.mxu0
        %v1178 = vadd.f32 %v1006, %v1177
        %1179 = vmatmul.f32.gmra.mxu0 %v923
        %v1180 = vpop.f32.mrf.mxu0
        %v1181 = vadd.f32 %v1006, %v1180
        %1182 = vmatmul.f32.gmra.mxu0 %v925
        %v1183 = vpop.f32.mrf.mxu0
        %v1184 = vadd.f32 %v1006, %v1183
        %1185 = vmatmul.f32.gmra.mxu0 %v927
        %v1186 = vpop.f32.mrf.mxu0
        %v1187 = vadd.f32 %v1006, %v1186
        %1188 = vmatmul.f32.gmra.mxu0 %v929
        %v1189 = vpop.f32.mrf.mxu0
        %v1190 = vadd.f32 %v1006, %v1189
        %1191 = vmatmul.f32.gmra.mxu0 %v931
        %v1192 = vpop.f32.mrf.mxu0
        %v1193 = vadd.f32 %v1006, %v1192
        %1194 = vmatmul.f32.gmra.mxu0 %v933
        %v1195 = vpop.f32.mrf.mxu0
        %v1196 = vadd.f32 %v1006, %v1195
        %1197 = vmatmul.f32.gmra.mxu0 %v935
        %v1198 = vpop.f32.mrf.mxu0
        %v1199 = vadd.f32 %v1006, %v1198
        %1200 = vmatmul.f32.gmra.mxu0 %v937
        %v1201 = vpop.f32.mrf.mxu0
        %v1202 = vadd.f32 %v1006, %v1201
        %1203 = vdwg.mxu0
        %1204 = vmatpush.msra.mxu0 %v1002
        %1205 = vmatpush.msra.mxu0 %v1000
        %1206 = vmatpush.msra.mxu0 %v998
        %1207 = vmatpush.msra.mxu0 %v996
        %1208 = vmatpush.msra.mxu0 %v994
        %1209 = vmatpush.msra.mxu0 %v992
        %1210 = vmatpush.msra.mxu0 %v990
        %1211 = vmatpush.msra.mxu0 %v988
        %1212 = vmatpush.msra.mxu0 %v986
        %1213 = vmatpush.msra.mxu0 %v984
        %1214 = vmatpush.msra.mxu0 %v982
        %1215 = vmatpush.msra.mxu0 %v980
        %1216 = vmatpush.msra.mxu0 %v978
        %1217 = vmatpush.msra.mxu0 %v976
        %1218 = vmatpush.msra.mxu0 %v974
        %1219 = vmatpush.msra.mxu0 %v972
        %1220 = vmatmul.f32.gmra.mxu0 %v908
        %v1221 = vpop.f32.mrf.mxu0
        %v1222 = vadd.f32 %v1157, %v1221
        %1223 = vmatmul.f32.gmra.mxu0 %v910
        %v1224 = vpop.f32.mrf.mxu0
        %v1225 = vadd.f32 %v1160, %v1224
        %1226 = vmatmul.f32.gmra.mxu0 %v912
        %v1227 = vpop.f32.mrf.mxu0
        %v1228 = vadd.f32 %v1163, %v1227
        %1229 = vmatmul.f32.gmra.mxu0 %v914
        %v1230 = vpop.f32.mrf.mxu0
        %v1231 = vadd.f32 %v1166, %v1230
        %1232 = vmatmul.f32.gmra.mxu0 %v916
        %v1233 = vpop.f32.mrf.mxu0
        %v1234 = vadd.f32 %v1169, %v1233
        %1235 = vmatmul.f32.gmra.mxu0 %v918
        %v1236 = vpop.f32.mrf.mxu0
        %v1237 = vadd.f32 %v1172, %v1236
        %1238 = vmatmul.f32.gmra.mxu0 %v920
        %v1239 = vpop.f32.mrf.mxu0
        %v1240 = vadd.f32 %v1175, %v1239
        %1241 = vmatmul.f32.gmra.mxu0 %v922
        %v1242 = vpop.f32.mrf.mxu0
        %v1243 = vadd.f32 %v1178, %v1242
        %1244 = vmatmul.f32.gmra.mxu0 %v924
        %v1245 = vpop.f32.mrf.mxu0
        %v1246 = vadd.f32 %v1181, %v1245
        %1247 = vmatmul.f32.gmra.mxu0 %v926
        %v1248 = vpop.f32.mrf.mxu0
        %v1249 = vadd.f32 %v1184, %v1248
        %1250 = vmatmul.f32.gmra.mxu0 %v928
        %v1251 = vpop.f32.mrf.mxu0
        %v1252 = vadd.f32 %v1187, %v1251
        %1253 = vmatmul.f32.gmra.mxu0 %v930
        %v1254 = vpop.f32.mrf.mxu0
        %v1255 = vadd.f32 %v1190, %v1254
        %1256 = vmatmul.f32.gmra.mxu0 %v932
        %v1257 = vpop.f32.mrf.mxu0
        %v1258 = vadd.f32 %v1193, %v1257
        %1259 = vmatmul.f32.gmra.mxu0 %v934
        %v1260 = vpop.f32.mrf.mxu0
        %v1261 = vadd.f32 %v1196, %v1260
        %1262 = vmatmul.f32.gmra.mxu0 %v936
        %v1263 = vpop.f32.mrf.mxu0
        %v1264 = vadd.f32 %v1199, %v1263
        %1265 = vmatmul.f32.gmra.mxu0 %v938
        %v1266 = vpop.f32.mrf.mxu0
        %v1267 = vadd.f32 %v1202, %v1266
        %1268 = vdwg.mxu0
        %v1269 = vmax.f32 %v1092, 0.0
        %v1270 = vmax.f32 %v1222, 0.0
        %v1271 = vmax.f32 %v1095, 0.0
        %v1272 = vmax.f32 %v1225, 0.0
        %v1273 = vmax.f32 %v1098, 0.0
        %v1274 = vmax.f32 %v1228, 0.0
        %v1275 = vmax.f32 %v1101, 0.0
        %v1276 = vmax.f32 %v1231, 0.0
        %v1277 = vmax.f32 %v1104, 0.0
        %v1278 = vmax.f32 %v1234, 0.0
        %v1279 = vmax.f32 %v1107, 0.0
        %v1280 = vmax.f32 %v1237, 0.0
        %v1281 = vmax.f32 %v1110, 0.0
        %v1282 = vmax.f32 %v1240, 0.0
        %v1283 = vmax.f32 %v1113, 0.0
        %v1284 = vmax.f32 %v1243, 0.0
        %v1285 = vmax.f32 %v1116, 0.0
        %v1286 = vmax.f32 %v1246, 0.0
        %v1287 = vmax.f32 %v1119, 0.0
        %v1288 = vmax.f32 %v1249, 0.0
        %v1289 = vmax.f32 %v1122, 0.0
        %v1290 = vmax.f32 %v1252, 0.0
        %v1291 = vmax.f32 %v1125, 0.0
        %v1292 = vmax.f32 %v1255, 0.0
        %v1293 = vmax.f32 %v1128, 0.0
        %v1294 = vmax.f32 %v1258, 0.0
        %v1295 = vmax.f32 %v1131, 0.0
        %v1296 = vmax.f32 %v1261, 0.0
        %v1297 = vmax.f32 %v1134, 0.0
        %v1298 = vmax.f32 %v1264, 0.0
        %v1299 = vmax.f32 %v1137, 0.0
        %v1300 = vmax.f32 %v1267, 0.0
        %v1301 = vld [vmem:[#allocation7] sm:$0xff]
        %v1302 = vld [vmem:[#allocation7 + $0x8] sm:$0xff]
        %v1303 = vld [vmem:[#allocation7 + $0x10] sm:$0xff]
        %v1304 = vld [vmem:[#allocation7 + $0x18] sm:$0xff]
        %v1305 = vld [vmem:[#allocation7 + $0x20] sm:$0xff]
        %v1306 = vld [vmem:[#allocation7 + $0x28] sm:$0xff]
        %v1307 = vld [vmem:[#allocation7 + $0x30] sm:$0xff]
        %v1308 = vld [vmem:[#allocation7 + $0x38] sm:$0xff]
        %v1309 = vld [vmem:[#allocation7 + $0x40] sm:$0xff]
        %v1310 = vld [vmem:[#allocation7 + $0x48] sm:$0xff]
        %v1311 = vld [vmem:[#allocation7 + $0x50] sm:$0xff]
        %v1312 = vld [vmem:[#allocation7 + $0x58] sm:$0xff]
        %v1313 = vld [vmem:[#allocation7 + $0x60] sm:$0xff]
        %v1314 = vld [vmem:[#allocation7 + $0x68] sm:$0xff]
        %v1315 = vld [vmem:[#allocation7 + $0x70] sm:$0xff]
        %v1316 = vld [vmem:[#allocation7 + $0x78] sm:$0xff]
        %v1317 = vld [vmem:[#allocation7 + $0x80] sm:$0xff]
        %v1318 = vld [vmem:[#allocation7 + $0x88] sm:$0xff]
        %v1319 = vld [vmem:[#allocation7 + $0x90] sm:$0xff]
        %v1320 = vld [vmem:[#allocation7 + $0x98] sm:$0xff]
        %v1321 = vld [vmem:[#allocation7 + $0xa0] sm:$0xff]
        %v1322 = vld [vmem:[#allocation7 + $0xa8] sm:$0xff]
        %v1323 = vld [vmem:[#allocation7 + $0xb0] sm:$0xff]
        %v1324 = vld [vmem:[#allocation7 + $0xb8] sm:$0xff]
        %v1325 = vld [vmem:[#allocation7 + $0xc0] sm:$0xff]
        %v1326 = vld [vmem:[#allocation7 + $0xc8] sm:$0xff]
        %v1327 = vld [vmem:[#allocation7 + $0xd0] sm:$0xff]
        %v1328 = vld [vmem:[#allocation7 + $0xd8] sm:$0xff]
        %v1329 = vld [vmem:[#allocation7 + $0xe0] sm:$0xff]
        %v1330 = vld [vmem:[#allocation7 + $0xe8] sm:$0xff]
        %v1331 = vld [vmem:[#allocation7 + $0xf0] sm:$0xff]
        %v1332 = vld [vmem:[#allocation7 + $0xf8] sm:$0xff]
        %v1333 = vld [vmem:[%s8] sm:$0x1]
        %v1335 = vperm.slane %v1333, 0
        %1337 = vmatpush.msra.mxu0 %v1316
        %1338 = vmatpush.msra.mxu0 %v1315
        %1339 = vmatpush.msra.mxu0 %v1314
        %1340 = vmatpush.msra.mxu0 %v1313
        %1341 = vmatpush.msra.mxu0 %v1312
        %1342 = vmatpush.msra.mxu0 %v1311
        %1343 = vmatpush.msra.mxu0 %v1310
        %1344 = vmatpush.msra.mxu0 %v1309
        %1345 = vmatpush.msra.mxu0 %v1308
        %1346 = vmatpush.msra.mxu0 %v1307
        %1347 = vmatpush.msra.mxu0 %v1306
        %1348 = vmatpush.msra.mxu0 %v1305
        %1349 = vmatpush.msra.mxu0 %v1304
        %1350 = vmatpush.msra.mxu0 %v1303
        %1351 = vmatpush.msra.mxu0 %v1302
        %1352 = vmatpush.msra.mxu0 %v1301
        %1353 = vmatmul.f32.gmra.mxu0 %v1269
        %v1354 = vpop.f32.mrf.mxu0
        %v1355 = vadd.f32 %v1335, %v1354
        %1356 = vmatmul.f32.gmra.mxu0 %v1271
        %v1357 = vpop.f32.mrf.mxu0
        %v1358 = vadd.f32 %v1335, %v1357
        %1359 = vmatmul.f32.gmra.mxu0 %v1273
        %v1360 = vpop.f32.mrf.mxu0
        %v1361 = vadd.f32 %v1335, %v1360
        %1362 = vmatmul.f32.gmra.mxu0 %v1275
        %v1363 = vpop.f32.mrf.mxu0
        %v1364 = vadd.f32 %v1335, %v1363
        %1365 = vmatmul.f32.gmra.mxu0 %v1277
        %v1366 = vpop.f32.mrf.mxu0
        %v1367 = vadd.f32 %v1335, %v1366
        %1368 = vmatmul.f32.gmra.mxu0 %v1279
        %v1369 = vpop.f32.mrf.mxu0
        %v1370 = vadd.f32 %v1335, %v1369
        %1371 = vmatmul.f32.gmra.mxu0 %v1281
        %v1372 = vpop.f32.mrf.mxu0
        %v1373 = vadd.f32 %v1335, %v1372
        %1374 = vmatmul.f32.gmra.mxu0 %v1283
        %v1375 = vpop.f32.mrf.mxu0
        %v1376 = vadd.f32 %v1335, %v1375
        %1377 = vmatmul.f32.gmra.mxu0 %v1285
        %v1378 = vpop.f32.mrf.mxu0
        %v1379 = vadd.f32 %v1335, %v1378
        %1380 = vmatmul.f32.gmra.mxu0 %v1287
        %v1381 = vpop.f32.mrf.mxu0
        %v1382 = vadd.f32 %v1335, %v1381
        %1383 = vmatmul.f32.gmra.mxu0 %v1289
        %v1384 = vpop.f32.mrf.mxu0
        %v1385 = vadd.f32 %v1335, %v1384
        %1386 = vmatmul.f32.gmra.mxu0 %v1291
        %v1387 = vpop.f32.mrf.mxu0
        %v1388 = vadd.f32 %v1335, %v1387
        %1389 = vmatmul.f32.gmra.mxu0 %v1293
        %v1390 = vpop.f32.mrf.mxu0
        %v1391 = vadd.f32 %v1335, %v1390
        %1392 = vmatmul.f32.gmra.mxu0 %v1295
        %v1393 = vpop.f32.mrf.mxu0
        %v1394 = vadd.f32 %v1335, %v1393
        %1395 = vmatmul.f32.gmra.mxu0 %v1297
        %v1396 = vpop.f32.mrf.mxu0
        %v1397 = vadd.f32 %v1335, %v1396
        %1398 = vmatmul.f32.gmra.mxu0 %v1299
        %v1399 = vpop.f32.mrf.mxu0
        %v1400 = vadd.f32 %v1335, %v1399
        %1401 = vdwg.mxu0
        %1402 = vmatpush.msra.mxu0 %v1332
        %1403 = vmatpush.msra.mxu0 %v1331
        %1404 = vmatpush.msra.mxu0 %v1330
        %1405 = vmatpush.msra.mxu0 %v1329
        %1406 = vmatpush.msra.mxu0 %v1328
        %1407 = vmatpush.msra.mxu0 %v1327
        %1408 = vmatpush.msra.mxu0 %v1326
        %1409 = vmatpush.msra.mxu0 %v1325
        %1410 = vmatpush.msra.mxu0 %v1324
        %1411 = vmatpush.msra.mxu0 %v1323
        %1412 = vmatpush.msra.mxu0 %v1322
        %1413 = vmatpush.msra.mxu0 %v1321
        %1414 = vmatpush.msra.mxu0 %v1320
        %1415 = vmatpush.msra.mxu0 %v1319
        %1416 = vmatpush.msra.mxu0 %v1318
        %1417 = vmatpush.msra.mxu0 %v1317
        %1418 = vmatmul.f32.gmra.mxu0 %v1270
        %v1419 = vpop.f32.mrf.mxu0
        %v1420 = vadd.f32 %v1355, %v1419
        %1421 = vmatmul.f32.gmra.mxu0 %v1272
        %v1422 = vpop.f32.mrf.mxu0
        %v1423 = vadd.f32 %v1358, %v1422
        %1424 = vmatmul.f32.gmra.mxu0 %v1274
        %v1425 = vpop.f32.mrf.mxu0
        %v1426 = vadd.f32 %v1361, %v1425
        %1427 = vmatmul.f32.gmra.mxu0 %v1276
        %v1428 = vpop.f32.mrf.mxu0
        %v1429 = vadd.f32 %v1364, %v1428
        %1430 = vmatmul.f32.gmra.mxu0 %v1278
        %v1431 = vpop.f32.mrf.mxu0
        %v1432 = vadd.f32 %v1367, %v1431
        %1433 = vmatmul.f32.gmra.mxu0 %v1280
        %v1434 = vpop.f32.mrf.mxu0
        %v1435 = vadd.f32 %v1370, %v1434
        %1436 = vmatmul.f32.gmra.mxu0 %v1282
        %v1437 = vpop.f32.mrf.mxu0
        %v1438 = vadd.f32 %v1373, %v1437
        %1439 = vmatmul.f32.gmra.mxu0 %v1284
        %v1440 = vpop.f32.mrf.mxu0
        %v1441 = vadd.f32 %v1376, %v1440
        %1442 = vmatmul.f32.gmra.mxu0 %v1286
        %v1443 = vpop.f32.mrf.mxu0
        %v1444 = vadd.f32 %v1379, %v1443
        %1445 = vmatmul.f32.gmra.mxu0 %v1288
        %v1446 = vpop.f32.mrf.mxu0
        %v1447 = vadd.f32 %v1382, %v1446
        %1448 = vmatmul.f32.gmra.mxu0 %v1290
        %v1449 = vpop.f32.mrf.mxu0
        %v1450 = vadd.f32 %v1385, %v1449
        %1451 = vmatmul.f32.gmra.mxu0 %v1292
        %v1452 = vpop.f32.mrf.mxu0
        %v1453 = vadd.f32 %v1388, %v1452
        %1454 = vmatmul.f32.gmra.mxu0 %v1294
        %v1455 = vpop.f32.mrf.mxu0
        %v1456 = vadd.f32 %v1391, %v1455
        %1457 = vmatmul.f32.gmra.mxu0 %v1296
        %v1458 = vpop.f32.mrf.mxu0
        %v1459 = vadd.f32 %v1394, %v1458
        %1460 = vmatmul.f32.gmra.mxu0 %v1298
        %v1461 = vpop.f32.mrf.mxu0
        %v1462 = vadd.f32 %v1397, %v1461
        %1463 = vmatmul.f32.gmra.mxu0 %v1300
        %v1464 = vpop.f32.mrf.mxu0
        %v1465 = vadd.f32 %v1400, %v1464
        %1466 = vdwg.mxu0
        %v1467 = vmax.f32 %v1420, 0.0
        %v1468 = vmax.f32 %v1423, 0.0
        %v1469 = vmax.f32 %v1426, 0.0
        %v1470 = vmax.f32 %v1429, 0.0
        %v1471 = vmax.f32 %v1432, 0.0
        %v1472 = vmax.f32 %v1435, 0.0
        %v1473 = vmax.f32 %v1438, 0.0
        %v1474 = vmax.f32 %v1441, 0.0
        %v1475 = vmax.f32 %v1444, 0.0
        %v1476 = vmax.f32 %v1447, 0.0
        %v1477 = vmax.f32 %v1450, 0.0
        %v1478 = vmax.f32 %v1453, 0.0
        %v1479 = vmax.f32 %v1456, 0.0
        %v1480 = vmax.f32 %v1459, 0.0
        %v1481 = vmax.f32 %v1462, 0.0
        %v1482 = vmax.f32 %v1465, 0.0
        %v1483 = vld [vmem:[#allocation8] sm:$0xff]
        %v1484 = vld [vmem:[#allocation8 + $0x8] sm:$0xff]
        %v1485 = vld [vmem:[#allocation8 + $0x10] sm:$0xff]
        %v1486 = vld [vmem:[#allocation8 + $0x18] sm:$0xff]
        %v1487 = vld [vmem:[#allocation8 + $0x20] sm:$0xff]
        %v1488 = vld [vmem:[#allocation8 + $0x28] sm:$0xff]
        %v1489 = vld [vmem:[#allocation8 + $0x30] sm:$0xff]
        %v1490 = vld [vmem:[#allocation8 + $0x38] sm:$0xff]
        %v1491 = vld [vmem:[#allocation8 + $0x40] sm:$0xff]
        %v1492 = vld [vmem:[#allocation8 + $0x48] sm:$0xff]
        %v1493 = vld [vmem:[#allocation8 + $0x50] sm:$0xff]
        %v1494 = vld [vmem:[#allocation8 + $0x58] sm:$0xff]
        %v1495 = vld [vmem:[#allocation8 + $0x60] sm:$0xff]
        %v1496 = vld [vmem:[#allocation8 + $0x68] sm:$0xff]
        %v1497 = vld [vmem:[#allocation8 + $0x70] sm:$0xff]
        %v1498 = vld [vmem:[#allocation8 + $0x78] sm:$0xff]
        %v1499 = vld [vmem:[%s10] sm:$0x1]
        %v1501 = vperm.slane %v1499, 0
        %1503 = vmatpush.msra.mxu0 %v1498
        %1504 = vmatpush.msra.mxu0 %v1497
        %1505 = vmatpush.msra.mxu0 %v1496
        %1506 = vmatpush.msra.mxu0 %v1495
        %1507 = vmatpush.msra.mxu0 %v1494
        %1508 = vmatpush.msra.mxu0 %v1493
        %1509 = vmatpush.msra.mxu0 %v1492
        %1510 = vmatpush.msra.mxu0 %v1491
        %1511 = vmatpush.msra.mxu0 %v1490
        %1512 = vmatpush.msra.mxu0 %v1489
        %1513 = vmatpush.msra.mxu0 %v1488
        %1514 = vmatpush.msra.mxu0 %v1487
        %1515 = vmatpush.msra.mxu0 %v1486
        %1516 = vmatpush.msra.mxu0 %v1485
        %1517 = vmatpush.msra.mxu0 %v1484
        %1518 = vmatpush.msra.mxu0 %v1483
        %1519 = vmatmul.f32.gmra.mxu0 %v1467
        %v1520 = vpop.f32.mrf.mxu0
        %v1521 = vadd.f32 %v1501, %v1520
        %1522 = vmatmul.f32.gmra.mxu0 %v1468
        %v1523 = vpop.f32.mrf.mxu0
        %v1524 = vadd.f32 %v1501, %v1523
        %1525 = vmatmul.f32.gmra.mxu0 %v1469
        %v1526 = vpop.f32.mrf.mxu0
        %v1527 = vadd.f32 %v1501, %v1526
        %1528 = vmatmul.f32.gmra.mxu0 %v1470
        %v1529 = vpop.f32.mrf.mxu0
        %v1530 = vadd.f32 %v1501, %v1529
        %1531 = vmatmul.f32.gmra.mxu0 %v1471
        %v1532 = vpop.f32.mrf.mxu0
        %v1533 = vadd.f32 %v1501, %v1532
        %1534 = vmatmul.f32.gmra.mxu0 %v1472
        %v1535 = vpop.f32.mrf.mxu0
        %v1536 = vadd.f32 %v1501, %v1535
        %1537 = vmatmul.f32.gmra.mxu0 %v1473
        %v1538 = vpop.f32.mrf.mxu0
        %v1539 = vadd.f32 %v1501, %v1538
        %1540 = vmatmul.f32.gmra.mxu0 %v1474
        %v1541 = vpop.f32.mrf.mxu0
        %v1542 = vadd.f32 %v1501, %v1541
        %1543 = vmatmul.f32.gmra.mxu0 %v1475
        %v1544 = vpop.f32.mrf.mxu0
        %v1545 = vadd.f32 %v1501, %v1544
        %1546 = vmatmul.f32.gmra.mxu0 %v1476
        %v1547 = vpop.f32.mrf.mxu0
        %v1548 = vadd.f32 %v1501, %v1547
        %1549 = vmatmul.f32.gmra.mxu0 %v1477
        %v1550 = vpop.f32.mrf.mxu0
        %v1551 = vadd.f32 %v1501, %v1550
        %1552 = vmatmul.f32.gmra.mxu0 %v1478
        %v1553 = vpop.f32.mrf.mxu0
        %v1554 = vadd.f32 %v1501, %v1553
        %1555 = vmatmul.f32.gmra.mxu0 %v1479
        %v1556 = vpop.f32.mrf.mxu0
        %v1557 = vadd.f32 %v1501, %v1556
        %1558 = vmatmul.f32.gmra.mxu0 %v1480
        %v1559 = vpop.f32.mrf.mxu0
        %v1560 = vadd.f32 %v1501, %v1559
        %1561 = vmatmul.f32.gmra.mxu0 %v1481
        %v1562 = vpop.f32.mrf.mxu0
        %v1563 = vadd.f32 %v1501, %v1562
        %1564 = vmatmul.f32.gmra.mxu0 %v1482
        %v1565 = vpop.f32.mrf.mxu0
        %v1566 = vadd.f32 %v1501, %v1565
        %1567 = vdwg.mxu0
        %1568 = vst [vmem:[%s459] sm:$0xff] %v1521
        %1569 = vst [vmem:[%s459 + $0x8] sm:$0xff] %v1524
        %1570 = vst [vmem:[%s459 + $0x10] sm:$0xff] %v1527
        %1571 = vst [vmem:[%s459 + $0x18] sm:$0xff] %v1530
        %1572 = vst [vmem:[%s459 + $0x20] sm:$0xff] %v1533
        %1573 = vst [vmem:[%s459 + $0x28] sm:$0xff] %v1536
        %1574 = vst [vmem:[%s459 + $0x30] sm:$0xff] %v1539
        %1575 = vst [vmem:[%s459 + $0x38] sm:$0xff] %v1542
        %1576 = vst [vmem:[%s459 + $0x40] sm:$0xff] %v1545
        %1577 = vst [vmem:[%s459 + $0x48] sm:$0xff] %v1548
        %1578 = vst [vmem:[%s459 + $0x50] sm:$0xff] %v1551
        %1579 = vst [vmem:[%s459 + $0x58] sm:$0xff] %v1554
        %1580 = vst [vmem:[%s459 + $0x60] sm:$0xff] %v1557
        %1581 = vst [vmem:[%s459 + $0x68] sm:$0xff] %v1560
        %1582 = vst [vmem:[%s459 + $0x70] sm:$0xff] %v1563
        %1583 = vst [vmem:[%s459 + $0x78] sm:$0xff] %v1566
        %s1584 = sand.u32 %s277, 1
        %s1585 = scalar_lea.sflag [#allocation4], %s1584
        %s1586 = sand.u32 %s277, 1
        %s1587 = smul.addr %s1586, 128
        %s1588 = scalar_lea.vmem [#allocation10], %s1587
        // Predicated region
        $region81: #{tpu_custom_call.1} parent=63 // pred_check
          %p1589 = pneg %p287
        $region82: #{tpu_custom_call.1} parent=63 // pred_check_branch
          %1591 = sbr.rel (%p1589) target = $region84
        $region83: #{tpu_custom_call.1} parent=63 // pred_region
          %s1592 = smul.u32 16, %s28
          %1594 = vsyncadd %s1585, 0
          %s1595 = smul.addr %s1592, 8
          %s1596 = scalar_lea.hbm %s11, %s1595
          %s1597 = sshll.u32 %s1588, 4
          %s1598 = int_to_ptr.vmem [resolvable:$true] %s1597
          %s1599 = sshll.u32 %s1596, 4
          %s1600 = int_to_ptr.hbm [resolvable:$true] %s1599
          %1605 = dma.vmem_to_hbm [thread:$0]  %s1598, 2048, %s1600, %s1585, 128, 128, 8
        $region84: #{tpu_custom_call.1} parent=63 // pred_fallthru
          _
      $region64: #{tpu_custom_call.1} parent=5 // pred_fallthru
        _
      %p1606 = scmp.le.s32.totalorder 2, %s23
      // Predicated region
      $region85: #{tpu_custom_call.1} parent=5 // pred_check
        %p1607 = pneg %p1606
      $region86: #{tpu_custom_call.1} parent=5 // pred_check_branch
        %1609 = sbr.rel (%p1607) target = $region88
      $region87: #{tpu_custom_call.1} parent=5 // pred_region
        %s1610 = ssub.s32 %s23, 2
        // Predicated region
        $region89: #{tpu_custom_call.1} parent=87 // pred_check
          %p1611 = pneg %p293
        $region90: #{tpu_custom_call.1} parent=87 // pred_check_branch
          %1613 = sbr.rel (%p1611) target = $region92
        $region91: #{tpu_custom_call.1} parent=87 // pred_region
          %s1614 = sand.u32 %s278, 1
          %s1615 = scalar_lea.sflag [#allocation4], %s1614
          %s1616 = sand.u32 %s278, 1
          %s1617 = smul.addr %s1616, 128
          %s1618 = scalar_lea.vmem [#allocation10], %s1617
          %1620 = dma.done %s1615, 2048
        $region92: #{tpu_custom_call.1} parent=87 // pred_fallthru
          _
      $region88: #{tpu_custom_call.1} parent=5 // pred_fallthru
        _
    $region6: #{tpu_custom_call.1} parent=1 // loop_footer
      %s27 = sadd.s32 1, %s23
    $region7: #{tpu_custom_call.1} parent=1 // loop_footer_branch
      %22 = sbr.rel target = $region3
    $region8: #{tpu_custom_call.1} parent=1 // loop_exit
      _
    %1621 = vsyncpa [#allocation3], 1
    %s1622 = scalar_lea.sflag [#allocation3], 1
    %1623 = vsyncpa %s1622, 1
    %1624 = vsyncpa [#allocation6], 1
    %1625 = vsyncpa [#allocation9], 1
    %1626 = vsyncpa [#allocation4], 1
    %s1627 = scalar_lea.sflag [#allocation4], 1
    %1628 = vsyncpa %s1627, 1

</llo_original>
